<compile_context>
chip_gen: v6e
topology: v6e:2x2x1
jax: 0.10.0
libtpu: 0.0.40
codegen_flags: <defaults>
</compile_context>

<pallas_src>
import functools

import jax
import jax.numpy as jnp
from jax.experimental import pallas as pl
from jax.experimental.pallas import tpu as pltpu

BN_EPS = 1e-5


# ------------------------------------------------------------------ kernel --

def _resblock_kernel(xp_ref, w1_ref, w2_ref, s1_ref, b1_ref, s2_ref, b2_ref,
                     s3_ref, b3_ref, mask_ref, out_ref, y1p_ref, *, H, W, K):
    HW = H * W
    pad = (K - 1) // 2
    left = pad * (W + 1)          # flat-padding offset of the "real" pixels
    C = out_ref.shape[1]

    xp = xp_ref[0]                # (C, Lp) bf16, flat zero-padded input
    masks = mask_ref[...]         # (K, HW)  f32 horizontal-tap validity masks
    s1, b1 = s1_ref[...], b1_ref[...]   # (C, 1) folded conv-bias + BN affine
    s2, b2 = s2_ref[...], b2_ref[...]
    s3, b3 = s3_ref[...], b3_ref[...]
    w1 = w1_ref[...]              # (K*K, C, C) bf16, per-tap (C_out, C_in)
    w2 = w2_ref[...]

    def conv(src):
        """src: (C, Lp) bf16 flat-padded activations -> (C, HW) f32 conv output."""
        def body(w_taps):
            acc = jnp.zeros((C, HW), jnp.float32)
            for dw in range(K):                       # horizontal tap
                part = jnp.zeros((C, HW), jnp.float32)
                for dh in range(K):                   # vertical tap
                    off = dh * W + dw                 # static lane offset
                    xs = src[:, off:off + HW]         # (C, HW) shifted view
                    part += jnp.dot(w_taps[dh * K + dw], xs,
                                    preferred_element_type=jnp.float32)
                # zero contributions that wrapped across a row boundary
                acc += part * masks[dw:dw + 1, :]
            return acc
        return body

    # ---- conv1 -> BN1 -> SiLU  (dropout = identity in eval mode) ------------
    y = conv(xp)(w1)
    y = y * s1 + b1
    y = y * jax.nn.sigmoid(y)

    # re-pad conv1 output inside VMEM so conv2 can use the same tap slicing
    y1p_ref[...] = jnp.zeros(y1p_ref.shape, y1p_ref.dtype)
    y1p_ref[:, left:left + HW] = y.astype(y1p_ref.dtype)

    # ---- conv2 -> BN2 -> SiLU ------------------------------------------------
    z = conv(y1p_ref[...])(w2)
    z = z * s2 + b2
    z = z * jax.nn.sigmoid(z)

    # ---- fused residual add -> BN3 -> SiLU (no extra HBM round trip) ---------
    z = z + xp[:, left:left + HW].astype(jnp.float32)
    z = z * s3 + b3
    z = z * jax.nn.sigmoid(z)

    out_ref[0] = z.astype(out_ref.dtype)


# ----------------------------------------------------------------- wrapper --

def _fold_bn(gamma, beta, mean, var, conv_bias=None):
    scale = gamma / jnp.sqrt(var + BN_EPS)
    bias = beta - mean * scale
    if conv_bias is not None:
        bias = bias + conv_bias * scale
    return (scale.reshape(-1, 1).astype(jnp.float32),
            bias.reshape(-1, 1).astype(jnp.float32))


def _tap_masks(H, W, K):
    """(K, H*W) masks zeroing horizontal taps that fall outside the row."""
    pad = (K - 1) // 2
    col = jnp.arange(H * W) % W
    rows = []
    for dw in range(K):
        s = dw - pad
        if s < 0:
            m = col >= (-s)
        elif s > 0:
            m = col < (W - s)
        else:
            m = jnp.ones((H * W,), bool)
        rows.append(m.astype(jnp.float32))
    return jnp.stack(rows)


def resblock_forward(x_nchw, params):
    N, C, H, W = x_nchw.shape
    K = params['w1'].shape[0]
    pad = (K - 1) // 2
    HW = H * W
    left = pad * (W + 1)
    Lp = HW + 2 * left

    # Flatten spatial dims (stays in NCHW order -> no transposes) and zero-pad
    # the flat axis so every conv tap is an in-bounds static lane-offset slice.
    xp = jnp.pad(x_nchw.reshape(N, C, HW), ((0, 0), (0, 0), (left, left)))
    xp = xp.astype(jnp.bfloat16)                       # bf16 MXU operands

    # Per-tap (C_out, C_in) weight matrices (HWIO -> tap-major), bf16.
    w1t = jnp.transpose(params['w1'], (0, 1, 3, 2)).reshape(K * K, C, C)
    w2t = jnp.transpose(params['w2'], (0, 1, 3, 2)).reshape(K * K, C, C)
    w1t = w1t.astype(jnp.bfloat16)
    w2t = w2t.astype(jnp.bfloat16)

    s1, b1 = _fold_bn(*params['bn1'], conv_bias=params['b1'])
    s2, b2 = _fold_bn(*params['bn2'], conv_bias=params['b2'])
    s3, b3 = _fold_bn(*params['bn3'])
    masks = _tap_masks(H, W, K)

    kernel = functools.partial(_resblock_kernel, H=H, W=W, K=K)
    const2 = lambda n: (0, 0)
    const3 = lambda n: (0, 0, 0)

    out_flat = pl.pallas_call(
        kernel,
        out_shape=jax.ShapeDtypeStruct((N, C, HW), x_nchw.dtype),
        grid=(N,),
        in_specs=[
            pl.BlockSpec((1, C, Lp), lambda n: (n, 0, 0)),   # padded input
            pl.BlockSpec((K * K, C, C), const3),             # conv1 taps (resident)
            pl.BlockSpec((K * K, C, C), const3),             # conv2 taps (resident)
            pl.BlockSpec((C, 1), const2),                    # scale1
            pl.BlockSpec((C, 1), const2),                    # bias1
            pl.BlockSpec((C, 1), const2),                    # scale2
            pl.BlockSpec((C, 1), const2),                    # bias2
            pl.BlockSpec((C, 1), const2),                    # scale3
            pl.BlockSpec((C, 1), const2),                    # bias3
            pl.BlockSpec((K, HW), const2),                   # horizontal tap masks
        ],
        out_specs=pl.BlockSpec((1, C, HW), lambda n: (n, 0, 0)),
        scratch_shapes=[pltpu.VMEM((C, Lp), jnp.bfloat16)],  # padded conv1 output
        compiler_params=pltpu.CompilerParams(
            dimension_semantics=("parallel",)),
    )(xp, w1t, w2t, s1, b1, s2, b2, s3, b3, masks)

    return out_flat.reshape(N, C, H, W)


# -------------------------------------------------------------- parameters --

def init_params(key, C, K):
    ks = jax.random.split(key, 7)
    bound = 1.0 / jnp.sqrt(C * K * K)

    def conv(k_w, k_b):
        w = jax.random.uniform(k_w, (K, K, C, C), jnp.float32, -bound, bound)  # HWIO
        b = jax.random.uniform(k_b, (C,), jnp.float32, -bound, bound)
        return w, b

    def bn(k):
        k1, k2, k3, k4 = jax.random.split(k, 4)
        gamma = 1.0 + 0.1 * jax.random.normal(k1, (C,), jnp.float32)
        beta = 0.1 * jax.random.normal(k2, (C,), jnp.float32)
        mean = 0.1 * jax.random.normal(k3, (C,), jnp.float32)
        var = 1.0 + 0.5 * jax.random.uniform(k4, (C,), jnp.float32)
        return gamma, beta, mean, var

    w1, b1 = conv(ks[0], ks[1])
    w2, b2 = conv(ks[2], ks[3])
    return dict(w1=w1, b1=b1, bn1=bn(ks[4]),
                w2=w2, b2=b2, bn2=bn(ks[5]),
                bn3=bn(ks[6]))


# ---------------------------------------------------------------- reference --

def resblock_reference(x_nchw, params):
    """Pure-JAX f32 reference (lax conv) for correctness checking."""
    x = jnp.transpose(x_nchw, (0, 2, 3, 1))

    def conv(t, w, b):
        y = jax.lax.conv_general_dilated(
            t, w, (1, 1), 'SAME', dimension_numbers=('NHWC', 'HWIO', 'NHWC'))
        return y + b

    def bn(t, p):
        g, be, m, v = p
        return (t - m) / jnp.sqrt(v + BN_EPS) * g + be

    silu = lambda t: t * jax.nn.sigmoid(t)
    y = silu(bn(conv(x, params['w1'], params['b1']), params['bn1']))
    y = silu(bn(conv(y, params['w2'], params['b2']), params['bn2']))
    out = silu(bn(y + x, params['bn3']))
    return jnp.transpose(out, (0, 3, 1, 2))


# -------------------------------------------------------------------- main --

if __name__ == "__main__":
    key = jax.random.PRNGKey(0)
    k_x, k_p = jax.random.split(key)
    N, C, H, W, K = 2, 8, 16, 16, 3
    x = jax.random.normal(k_x, (N, C, H, W), jnp.float32)   # NCHW, as PyTorch
    params = init_params(k_p, C, K)

    out = jax.jit(resblock_forward)(x, params)
    out = jax.block_until_ready(out)

    ref = resblock_reference(x, params)
    assert out.shape == x.shape, (out.shape, x.shape)
    max_err = float(jnp.max(jnp.abs(out - ref)))
    # bf16 MXU operands with f32 accumulation/epilogue -> bf16-level tolerance.
    assert jnp.allclose(out, ref, atol=5e-2, rtol=5e-2), f"max abs err {max_err}"
    print("KERNEL_OK")
</pallas_src>

<mosaic_0001>
module attributes {stable_mosaic.version = 11 : i64} {
  func.func @_resblock_kernel(%arg0: i32, %arg1: memref<1x8x290xbf16, #tpu.memory_space<vmem>>, %arg2: memref<9x8x8xbf16, #tpu.memory_space<vmem>>, %arg3: memref<9x8x8xbf16, #tpu.memory_space<vmem>>, %arg4: memref<8x1xf32, #tpu.memory_space<vmem>>, %arg5: memref<8x1xf32, #tpu.memory_space<vmem>>, %arg6: memref<8x1xf32, #tpu.memory_space<vmem>>, %arg7: memref<8x1xf32, #tpu.memory_space<vmem>>, %arg8: memref<8x1xf32, #tpu.memory_space<vmem>>, %arg9: memref<8x1xf32, #tpu.memory_space<vmem>>, %arg10: memref<3x256xf32, #tpu.memory_space<vmem>>, %arg11: memref<1x8x256xf32, #tpu.memory_space<vmem>>, %arg12: memref<8x290xbf16, #tpu.memory_space<vmem>>) attributes {dimension_semantics = [#tpu.dimension_semantics<parallel>], iteration_bounds = array<i64: 2>, scalar_prefetch = 0 : i64, scratch_operands = 1 : i64, tpu.core_type = #tpu.core_type<tc>, window_params = [{transform_indices = @transform_0, window_bounds = array<i64: 1, 8, 290>}, {pipeline_mode = #tpu.pipeline_mode<synchronous>, transform_indices = @transform_1, window_bounds = array<i64: 9, 8, 8>}, {pipeline_mode = #tpu.pipeline_mode<synchronous>, transform_indices = @transform_2, window_bounds = array<i64: 9, 8, 8>}, {pipeline_mode = #tpu.pipeline_mode<synchronous>, transform_indices = @transform_3, window_bounds = array<i64: 8, 1>}, {pipeline_mode = #tpu.pipeline_mode<synchronous>, transform_indices = @transform_4, window_bounds = array<i64: 8, 1>}, {pipeline_mode = #tpu.pipeline_mode<synchronous>, transform_indices = @transform_5, window_bounds = array<i64: 8, 1>}, {pipeline_mode = #tpu.pipeline_mode<synchronous>, transform_indices = @transform_6, window_bounds = array<i64: 8, 1>}, {pipeline_mode = #tpu.pipeline_mode<synchronous>, transform_indices = @transform_7, window_bounds = array<i64: 8, 1>}, {pipeline_mode = #tpu.pipeline_mode<synchronous>, transform_indices = @transform_8, window_bounds = array<i64: 8, 1>}, {pipeline_mode = #tpu.pipeline_mode<synchronous>, transform_indices = @transform_9, window_bounds = array<i64: 3, 256>}, {transform_indices = @transform_10, window_bounds = array<i64: 1, 8, 256>}]} {
    %c0 = arith.constant 0 : index
    %c0_0 = arith.constant 0 : index
    %c0_1 = arith.constant 0 : index
    %0 = vector.load %arg1[%c0, %c0_0, %c0_1] : memref<1x8x290xbf16, #tpu.memory_space<vmem>>, vector<1x8x290xbf16>
    %1 = vector.shape_cast %0 : vector<1x8x290xbf16> to vector<8x290xbf16>
    %c0_2 = arith.constant 0 : index
    %c0_3 = arith.constant 0 : index
    %2 = vector.load %arg10[%c0_2, %c0_3] : memref<3x256xf32, #tpu.memory_space<vmem>>, vector<3x256xf32>
    %c0_4 = arith.constant 0 : index
    %c0_5 = arith.constant 0 : index
    %3 = vector.load %arg4[%c0_4, %c0_5] : memref<8x1xf32, #tpu.memory_space<vmem>>, vector<8x1xf32>
    %c0_6 = arith.constant 0 : index
    %c0_7 = arith.constant 0 : index
    %4 = vector.load %arg5[%c0_6, %c0_7] : memref<8x1xf32, #tpu.memory_space<vmem>>, vector<8x1xf32>
    %c0_8 = arith.constant 0 : index
    %c0_9 = arith.constant 0 : index
    %5 = vector.load %arg6[%c0_8, %c0_9] : memref<8x1xf32, #tpu.memory_space<vmem>>, vector<8x1xf32>
    %c0_10 = arith.constant 0 : index
    %c0_11 = arith.constant 0 : index
    %6 = vector.load %arg7[%c0_10, %c0_11] : memref<8x1xf32, #tpu.memory_space<vmem>>, vector<8x1xf32>
    %c0_12 = arith.constant 0 : index
    %c0_13 = arith.constant 0 : index
    %7 = vector.load %arg8[%c0_12, %c0_13] : memref<8x1xf32, #tpu.memory_space<vmem>>, vector<8x1xf32>
    %c0_14 = arith.constant 0 : index
    %c0_15 = arith.constant 0 : index
    %8 = vector.load %arg9[%c0_14, %c0_15] : memref<8x1xf32, #tpu.memory_space<vmem>>, vector<8x1xf32>
    %c0_16 = arith.constant 0 : index
    %c0_17 = arith.constant 0 : index
    %c0_18 = arith.constant 0 : index
    %9 = vector.load %arg2[%c0_16, %c0_17, %c0_18] : memref<9x8x8xbf16, #tpu.memory_space<vmem>>, vector<9x8x8xbf16>
    %c0_19 = arith.constant 0 : index
    %c0_20 = arith.constant 0 : index
    %c0_21 = arith.constant 0 : index
    %10 = vector.load %arg3[%c0_19, %c0_20, %c0_21] : memref<9x8x8xbf16, #tpu.memory_space<vmem>>, vector<9x8x8xbf16>
    %cst = arith.constant 0.000000e+00 : f32
    %11 = vector.broadcast %cst : f32 to vector<8x256xf32>
    %cst_22 = arith.constant 0.000000e+00 : f32
    %12 = vector.broadcast %cst_22 : f32 to vector<8x256xf32>
    %13 = vector.extract_strided_slice %1 {offsets = [0, 0], sizes = [8, 256], strides = [1, 1]} : vector<8x290xbf16> to vector<8x256xbf16>
    %14 = vector.extract_strided_slice %9 {offsets = [0, 0, 0], sizes = [1, 8, 8], strides = [1, 1, 1]} : vector<9x8x8xbf16> to vector<1x8x8xbf16>
    %15 = vector.shape_cast %14 : vector<1x8x8xbf16> to vector<8x8xbf16>
    %cst_23 = arith.constant dense<0.000000e+00> : vector<8x256xf32>
    %16 = tpu.matmul %15, %13, %cst_23 {dimension_numbers = #tpu.dot_dimension_numbers<[1], [0], [0], [1], [0, 0, 1, 1], [], []>} : vector<8x8xbf16>, vector<8x256xbf16>, vector<8x256xf32> -> vector<8x256xf32>
    %17 = arith.addf %12, %16 : vector<8x256xf32>
    %18 = vector.extract_strided_slice %1 {offsets = [0, 16], sizes = [8, 256], strides = [1, 1]} : vector<8x290xbf16> to vector<8x256xbf16>
    %19 = vector.extract_strided_slice %9 {offsets = [3, 0, 0], sizes = [1, 8, 8], strides = [1, 1, 1]} : vector<9x8x8xbf16> to vector<1x8x8xbf16>
    %20 = vector.shape_cast %19 : vector<1x8x8xbf16> to vector<8x8xbf16>
    %cst_24 = arith.constant dense<0.000000e+00> : vector<8x256xf32>
    %21 = tpu.matmul %20, %18, %cst_24 {dimension_numbers = #tpu.dot_dimension_numbers<[1], [0], [0], [1], [0, 0, 1, 1], [], []>} : vector<8x8xbf16>, vector<8x256xbf16>, vector<8x256xf32> -> vector<8x256xf32>
    %22 = arith.addf %17, %21 : vector<8x256xf32>
    %23 = vector.extract_strided_slice %1 {offsets = [0, 32], sizes = [8, 256], strides = [1, 1]} : vector<8x290xbf16> to vector<8x256xbf16>
    %24 = vector.extract_strided_slice %9 {offsets = [6, 0, 0], sizes = [1, 8, 8], strides = [1, 1, 1]} : vector<9x8x8xbf16> to vector<1x8x8xbf16>
    %25 = vector.shape_cast %24 : vector<1x8x8xbf16> to vector<8x8xbf16>
    %cst_25 = arith.constant dense<0.000000e+00> : vector<8x256xf32>
    %26 = tpu.matmul %25, %23, %cst_25 {dimension_numbers = #tpu.dot_dimension_numbers<[1], [0], [0], [1], [0, 0, 1, 1], [], []>} : vector<8x8xbf16>, vector<8x256xbf16>, vector<8x256xf32> -> vector<8x256xf32>
    %27 = arith.addf %22, %26 : vector<8x256xf32>
    %28 = vector.extract_strided_slice %2 {offsets = [0, 0], sizes = [1, 256], strides = [1, 1]} : vector<3x256xf32> to vector<1x256xf32>
    %29 = vector.broadcast %28 : vector<1x256xf32> to vector<8x256xf32>
    %30 = arith.mulf %27, %29 : vector<8x256xf32>
    %31 = arith.addf %11, %30 : vector<8x256xf32>
    %cst_26 = arith.constant 0.000000e+00 : f32
    %32 = vector.broadcast %cst_26 : f32 to vector<8x256xf32>
    %33 = vector.extract_strided_slice %1 {offsets = [0, 1], sizes = [8, 256], strides = [1, 1]} : vector<8x290xbf16> to vector<8x256xbf16>
    %34 = vector.extract_strided_slice %9 {offsets = [1, 0, 0], sizes = [1, 8, 8], strides = [1, 1, 1]} : vector<9x8x8xbf16> to vector<1x8x8xbf16>
    %35 = vector.shape_cast %34 : vector<1x8x8xbf16> to vector<8x8xbf16>
    %cst_27 = arith.constant dense<0.000000e+00> : vector<8x256xf32>
    %36 = tpu.matmul %35, %33, %cst_27 {dimension_numbers = #tpu.dot_dimension_numbers<[1], [0], [0], [1], [0, 0, 1, 1], [], []>} : vector<8x8xbf16>, vector<8x256xbf16>, vector<8x256xf32> -> vector<8x256xf32>
    %37 = arith.addf %32, %36 : vector<8x256xf32>
    %38 = vector.extract_strided_slice %1 {offsets = [0, 17], sizes = [8, 256], strides = [1, 1]} : vector<8x290xbf16> to vector<8x256xbf16>
    %39 = vector.extract_strided_slice %9 {offsets = [4, 0, 0], sizes = [1, 8, 8], strides = [1, 1, 1]} : vector<9x8x8xbf16> to vector<1x8x8xbf16>
    %40 = vector.shape_cast %39 : vector<1x8x8xbf16> to vector<8x8xbf16>
    %cst_28 = arith.constant dense<0.000000e+00> : vector<8x256xf32>
    %41 = tpu.matmul %40, %38, %cst_28 {dimension_numbers = #tpu.dot_dimension_numbers<[1], [0], [0], [1], [0, 0, 1, 1], [], []>} : vector<8x8xbf16>, vector<8x256xbf16>, vector<8x256xf32> -> vector<8x256xf32>
    %42 = arith.addf %37, %41 : vector<8x256xf32>
    %43 = vector.extract_strided_slice %1 {offsets = [0, 33], sizes = [8, 256], strides = [1, 1]} : vector<8x290xbf16> to vector<8x256xbf16>
    %44 = vector.extract_strided_slice %9 {offsets = [7, 0, 0], sizes = [1, 8, 8], strides = [1, 1, 1]} : vector<9x8x8xbf16> to vector<1x8x8xbf16>
    %45 = vector.shape_cast %44 : vector<1x8x8xbf16> to vector<8x8xbf16>
    %cst_29 = arith.constant dense<0.000000e+00> : vector<8x256xf32>
    %46 = tpu.matmul %45, %43, %cst_29 {dimension_numbers = #tpu.dot_dimension_numbers<[1], [0], [0], [1], [0, 0, 1, 1], [], []>} : vector<8x8xbf16>, vector<8x256xbf16>, vector<8x256xf32> -> vector<8x256xf32>
    %47 = arith.addf %42, %46 : vector<8x256xf32>
    %48 = vector.extract_strided_slice %2 {offsets = [1, 0], sizes = [1, 256], strides = [1, 1]} : vector<3x256xf32> to vector<1x256xf32>
    %49 = vector.broadcast %48 : vector<1x256xf32> to vector<8x256xf32>
    %50 = arith.mulf %47, %49 : vector<8x256xf32>
    %51 = arith.addf %31, %50 : vector<8x256xf32>
    %cst_30 = arith.constant 0.000000e+00 : f32
    %52 = vector.broadcast %cst_30 : f32 to vector<8x256xf32>
    %53 = vector.extract_strided_slice %1 {offsets = [0, 2], sizes = [8, 256], strides = [1, 1]} : vector<8x290xbf16> to vector<8x256xbf16>
    %54 = vector.extract_strided_slice %9 {offsets = [2, 0, 0], sizes = [1, 8, 8], strides = [1, 1, 1]} : vector<9x8x8xbf16> to vector<1x8x8xbf16>
    %55 = vector.shape_cast %54 : vector<1x8x8xbf16> to vector<8x8xbf16>
    %cst_31 = arith.constant dense<0.000000e+00> : vector<8x256xf32>
    %56 = tpu.matmul %55, %53, %cst_31 {dimension_numbers = #tpu.dot_dimension_numbers<[1], [0], [0], [1], [0, 0, 1, 1], [], []>} : vector<8x8xbf16>, vector<8x256xbf16>, vector<8x256xf32> -> vector<8x256xf32>
    %57 = arith.addf %52, %56 : vector<8x256xf32>
    %58 = vector.extract_strided_slice %1 {offsets = [0, 18], sizes = [8, 256], strides = [1, 1]} : vector<8x290xbf16> to vector<8x256xbf16>
    %59 = vector.extract_strided_slice %9 {offsets = [5, 0, 0], sizes = [1, 8, 8], strides = [1, 1, 1]} : vector<9x8x8xbf16> to vector<1x8x8xbf16>
    %60 = vector.shape_cast %59 : vector<1x8x8xbf16> to vector<8x8xbf16>
    %cst_32 = arith.constant dense<0.000000e+00> : vector<8x256xf32>
    %61 = tpu.matmul %60, %58, %cst_32 {dimension_numbers = #tpu.dot_dimension_numbers<[1], [0], [0], [1], [0, 0, 1, 1], [], []>} : vector<8x8xbf16>, vector<8x256xbf16>, vector<8x256xf32> -> vector<8x256xf32>
    %62 = arith.addf %57, %61 : vector<8x256xf32>
    %63 = vector.extract_strided_slice %1 {offsets = [0, 34], sizes = [8, 256], strides = [1, 1]} : vector<8x290xbf16> to vector<8x256xbf16>
    %64 = vector.extract_strided_slice %9 {offsets = [8, 0, 0], sizes = [1, 8, 8], strides = [1, 1, 1]} : vector<9x8x8xbf16> to vector<1x8x8xbf16>
    %65 = vector.shape_cast %64 : vector<1x8x8xbf16> to vector<8x8xbf16>
    %cst_33 = arith.constant dense<0.000000e+00> : vector<8x256xf32>
    %66 = tpu.matmul %65, %63, %cst_33 {dimension_numbers = #tpu.dot_dimension_numbers<[1], [0], [0], [1], [0, 0, 1, 1], [], []>} : vector<8x8xbf16>, vector<8x256xbf16>, vector<8x256xf32> -> vector<8x256xf32>
    %67 = arith.addf %62, %66 : vector<8x256xf32>
    %68 = vector.extract_strided_slice %2 {offsets = [2, 0], sizes = [1, 256], strides = [1, 1]} : vector<3x256xf32> to vector<1x256xf32>
    %69 = vector.broadcast %68 : vector<1x256xf32> to vector<8x256xf32>
    %70 = arith.mulf %67, %69 : vector<8x256xf32>
    %71 = arith.addf %51, %70 : vector<8x256xf32>
    %72 = vector.broadcast %3 : vector<8x1xf32> to vector<8x256xf32>
    %73 = arith.mulf %71, %72 : vector<8x256xf32>
    %74 = vector.broadcast %4 : vector<8x1xf32> to vector<8x256xf32>
    %75 = arith.addf %73, %74 : vector<8x256xf32>
    %76 = arith.negf %75 : vector<8x256xf32>
    %77 = math.exp %76 : vector<8x256xf32>
    %cst_34 = arith.constant 1.000000e+00 : f32
    %78 = vector.broadcast %cst_34 : f32 to vector<8x256xf32>
    %79 = arith.addf %78, %77 : vector<8x256xf32>
    %80 = arith.divf %78, %79 : vector<8x256xf32>
    %81 = arith.mulf %75, %80 : vector<8x256xf32>
    %cst_35 = arith.constant 0.000000e+00 : bf16
    %82 = vector.broadcast %cst_35 : bf16 to vector<8x290xbf16>
    %c0_36 = arith.constant 0 : index
    %c0_37 = arith.constant 0 : index
    %83 = vector.load %arg12[%c0_36, %c0_37] : memref<8x290xbf16, #tpu.memory_space<vmem>>, vector<8x290xbf16>
    tpu.vector_store %arg12[%c0_36, %c0_37], %82 {strides = array<i32>} : memref<8x290xbf16, #tpu.memory_space<vmem>>, vector<8x290xbf16>,
    %84 = arith.truncf %81 : vector<8x256xf32> to vector<8x256xbf16>
    %c0_38 = arith.constant 0 : index
    %c17 = arith.constant 17 : index
    %85 = vector.load %arg12[%c0_38, %c17] : memref<8x290xbf16, #tpu.memory_space<vmem>>, vector<8x256xbf16>
    tpu.vector_store %arg12[%c0_38, %c17], %84 {strides = array<i32>} : memref<8x290xbf16, #tpu.memory_space<vmem>>, vector<8x256xbf16>,
    %c0_39 = arith.constant 0 : index
    %c0_40 = arith.constant 0 : index
    %86 = vector.load %arg12[%c0_39, %c0_40] : memref<8x290xbf16, #tpu.memory_space<vmem>>, vector<8x290xbf16>
    %cst_41 = arith.constant 0.000000e+00 : f32
    %87 = vector.broadcast %cst_41 : f32 to vector<8x256xf32>
    %cst_42 = arith.constant 0.000000e+00 : f32
    %88 = vector.broadcast %cst_42 : f32 to vector<8x256xf32>
    %89 = vector.extract_strided_slice %86 {offsets = [0, 0], sizes = [8, 256], strides = [1, 1]} : vector<8x290xbf16> to vector<8x256xbf16>
    %90 = vector.extract_strided_slice %10 {offsets = [0, 0, 0], sizes = [1, 8, 8], strides = [1, 1, 1]} : vector<9x8x8xbf16> to vector<1x8x8xbf16>
    %91 = vector.shape_cast %90 : vector<1x8x8xbf16> to vector<8x8xbf16>
    %cst_43 = arith.constant dense<0.000000e+00> : vector<8x256xf32>
    %92 = tpu.matmul %91, %89, %cst_43 {dimension_numbers = #tpu.dot_dimension_numbers<[1], [0], [0], [1], [0, 0, 1, 1], [], []>} : vector<8x8xbf16>, vector<8x256xbf16>, vector<8x256xf32> -> vector<8x256xf32>
    %93 = arith.addf %88, %92 : vector<8x256xf32>
    %94 = vector.extract_strided_slice %86 {offsets = [0, 16], sizes = [8, 256], strides = [1, 1]} : vector<8x290xbf16> to vector<8x256xbf16>
    %95 = vector.extract_strided_slice %10 {offsets = [3, 0, 0], sizes = [1, 8, 8], strides = [1, 1, 1]} : vector<9x8x8xbf16> to vector<1x8x8xbf16>
    %96 = vector.shape_cast %95 : vector<1x8x8xbf16> to vector<8x8xbf16>
    %cst_44 = arith.constant dense<0.000000e+00> : vector<8x256xf32>
    %97 = tpu.matmul %96, %94, %cst_44 {dimension_numbers = #tpu.dot_dimension_numbers<[1], [0], [0], [1], [0, 0, 1, 1], [], []>} : vector<8x8xbf16>, vector<8x256xbf16>, vector<8x256xf32> -> vector<8x256xf32>
    %98 = arith.addf %93, %97 : vector<8x256xf32>
    %99 = vector.extract_strided_slice %86 {offsets = [0, 32], sizes = [8, 256], strides = [1, 1]} : vector<8x290xbf16> to vector<8x256xbf16>
    %100 = vector.extract_strided_slice %10 {offsets = [6, 0, 0], sizes = [1, 8, 8], strides = [1, 1, 1]} : vector<9x8x8xbf16> to vector<1x8x8xbf16>
    %101 = vector.shape_cast %100 : vector<1x8x8xbf16> to vector<8x8xbf16>
    %cst_45 = arith.constant dense<0.000000e+00> : vector<8x256xf32>
    %102 = tpu.matmul %101, %99, %cst_45 {dimension_numbers = #tpu.dot_dimension_numbers<[1], [0], [0], [1], [0, 0, 1, 1], [], []>} : vector<8x8xbf16>, vector<8x256xbf16>, vector<8x256xf32> -> vector<8x256xf32>
    %103 = arith.addf %98, %102 : vector<8x256xf32>
    %104 = vector.extract_strided_slice %2 {offsets = [0, 0], sizes = [1, 256], strides = [1, 1]} : vector<3x256xf32> to vector<1x256xf32>
    %105 = vector.broadcast %104 : vector<1x256xf32> to vector<8x256xf32>
    %106 = arith.mulf %103, %105 : vector<8x256xf32>
    %107 = arith.addf %87, %106 : vector<8x256xf32>
    %cst_46 = arith.constant 0.000000e+00 : f32
    %108 = vector.broadcast %cst_46 : f32 to vector<8x256xf32>
    %109 = vector.extract_strided_slice %86 {offsets = [0, 1], sizes = [8, 256], strides = [1, 1]} : vector<8x290xbf16> to vector<8x256xbf16>
    %110 = vector.extract_strided_slice %10 {offsets = [1, 0, 0], sizes = [1, 8, 8], strides = [1, 1, 1]} : vector<9x8x8xbf16> to vector<1x8x8xbf16>
    %111 = vector.shape_cast %110 : vector<1x8x8xbf16> to vector<8x8xbf16>
    %cst_47 = arith.constant dense<0.000000e+00> : vector<8x256xf32>
    %112 = tpu.matmul %111, %109, %cst_47 {dimension_numbers = #tpu.dot_dimension_numbers<[1], [0], [0], [1], [0, 0, 1, 1], [], []>} : vector<8x8xbf16>, vector<8x256xbf16>, vector<8x256xf32> -> vector<8x256xf32>
    %113 = arith.addf %108, %112 : vector<8x256xf32>
    %114 = vector.extract_strided_slice %86 {offsets = [0, 17], sizes = [8, 256], strides = [1, 1]} : vector<8x290xbf16> to vector<8x256xbf16>
    %115 = vector.extract_strided_slice %10 {offsets = [4, 0, 0], sizes = [1, 8, 8], strides = [1, 1, 1]} : vector<9x8x8xbf16> to vector<1x8x8xbf16>
    %116 = vector.shape_cast %115 : vector<1x8x8xbf16> to vector<8x8xbf16>
    %cst_48 = arith.constant dense<0.000000e+00> : vector<8x256xf32>
    %117 = tpu.matmul %116, %114, %cst_48 {dimension_numbers = #tpu.dot_dimension_numbers<[1], [0], [0], [1], [0, 0, 1, 1], [], []>} : vector<8x8xbf16>, vector<8x256xbf16>, vector<8x256xf32> -> vector<8x256xf32>
    %118 = arith.addf %113, %117 : vector<8x256xf32>
    %119 = vector.extract_strided_slice %86 {offsets = [0, 33], sizes = [8, 256], strides = [1, 1]} : vector<8x290xbf16> to vector<8x256xbf16>
    %120 = vector.extract_strided_slice %10 {offsets = [7, 0, 0], sizes = [1, 8, 8], strides = [1, 1, 1]} : vector<9x8x8xbf16> to vector<1x8x8xbf16>
    %121 = vector.shape_cast %120 : vector<1x8x8xbf16> to vector<8x8xbf16>
    %cst_49 = arith.constant dense<0.000000e+00> : vector<8x256xf32>
    %122 = tpu.matmul %121, %119, %cst_49 {dimension_numbers = #tpu.dot_dimension_numbers<[1], [0], [0], [1], [0, 0, 1, 1], [], []>} : vector<8x8xbf16>, vector<8x256xbf16>, vector<8x256xf32> -> vector<8x256xf32>
    %123 = arith.addf %118, %122 : vector<8x256xf32>
    %124 = vector.extract_strided_slice %2 {offsets = [1, 0], sizes = [1, 256], strides = [1, 1]} : vector<3x256xf32> to vector<1x256xf32>
    %125 = vector.broadcast %124 : vector<1x256xf32> to vector<8x256xf32>
    %126 = arith.mulf %123, %125 : vector<8x256xf32>
    %127 = arith.addf %107, %126 : vector<8x256xf32>
    %cst_50 = arith.constant 0.000000e+00 : f32
    %128 = vector.broadcast %cst_50 : f32 to vector<8x256xf32>
    %129 = vector.extract_strided_slice %86 {offsets = [0, 2], sizes = [8, 256], strides = [1, 1]} : vector<8x290xbf16> to vector<8x256xbf16>
    %130 = vector.extract_strided_slice %10 {offsets = [2, 0, 0], sizes = [1, 8, 8], strides = [1, 1, 1]} : vector<9x8x8xbf16> to vector<1x8x8xbf16>
    %131 = vector.shape_cast %130 : vector<1x8x8xbf16> to vector<8x8xbf16>
    %cst_51 = arith.constant dense<0.000000e+00> : vector<8x256xf32>
    %132 = tpu.matmul %131, %129, %cst_51 {dimension_numbers = #tpu.dot_dimension_numbers<[1], [0], [0], [1], [0, 0, 1, 1], [], []>} : vector<8x8xbf16>, vector<8x256xbf16>, vector<8x256xf32> -> vector<8x256xf32>
    %133 = arith.addf %128, %132 : vector<8x256xf32>
    %134 = vector.extract_strided_slice %86 {offsets = [0, 18], sizes = [8, 256], strides = [1, 1]} : vector<8x290xbf16> to vector<8x256xbf16>
    %135 = vector.extract_strided_slice %10 {offsets = [5, 0, 0], sizes = [1, 8, 8], strides = [1, 1, 1]} : vector<9x8x8xbf16> to vector<1x8x8xbf16>
    %136 = vector.shape_cast %135 : vector<1x8x8xbf16> to vector<8x8xbf16>
    %cst_52 = arith.constant dense<0.000000e+00> : vector<8x256xf32>
    %137 = tpu.matmul %136, %134, %cst_52 {dimension_numbers = #tpu.dot_dimension_numbers<[1], [0], [0], [1], [0, 0, 1, 1], [], []>} : vector<8x8xbf16>, vector<8x256xbf16>, vector<8x256xf32> -> vector<8x256xf32>
    %138 = arith.addf %133, %137 : vector<8x256xf32>
    %139 = vector.extract_strided_slice %86 {offsets = [0, 34], sizes = [8, 256], strides = [1, 1]} : vector<8x290xbf16> to vector<8x256xbf16>
    %140 = vector.extract_strided_slice %10 {offsets = [8, 0, 0], sizes = [1, 8, 8], strides = [1, 1, 1]} : vector<9x8x8xbf16> to vector<1x8x8xbf16>
    %141 = vector.shape_cast %140 : vector<1x8x8xbf16> to vector<8x8xbf16>
    %cst_53 = arith.constant dense<0.000000e+00> : vector<8x256xf32>
    %142 = tpu.matmul %141, %139, %cst_53 {dimension_numbers = #tpu.dot_dimension_numbers<[1], [0], [0], [1], [0, 0, 1, 1], [], []>} : vector<8x8xbf16>, vector<8x256xbf16>, vector<8x256xf32> -> vector<8x256xf32>
    %143 = arith.addf %138, %142 : vector<8x256xf32>
    %144 = vector.extract_strided_slice %2 {offsets = [2, 0], sizes = [1, 256], strides = [1, 1]} : vector<3x256xf32> to vector<1x256xf32>
    %145 = vector.broadcast %144 : vector<1x256xf32> to vector<8x256xf32>
    %146 = arith.mulf %143, %145 : vector<8x256xf32>
    %147 = arith.addf %127, %146 : vector<8x256xf32>
    %148 = vector.broadcast %5 : vector<8x1xf32> to vector<8x256xf32>
    %149 = arith.mulf %147, %148 : vector<8x256xf32>
    %150 = vector.broadcast %6 : vector<8x1xf32> to vector<8x256xf32>
    %151 = arith.addf %149, %150 : vector<8x256xf32>
    %152 = arith.negf %151 : vector<8x256xf32>
    %153 = math.exp %152 : vector<8x256xf32>
    %cst_54 = arith.constant 1.000000e+00 : f32
    %154 = vector.broadcast %cst_54 : f32 to vector<8x256xf32>
    %155 = arith.addf %154, %153 : vector<8x256xf32>
    %156 = arith.divf %154, %155 : vector<8x256xf32>
    %157 = arith.mulf %151, %156 : vector<8x256xf32>
    %158 = vector.extract_strided_slice %1 {offsets = [0, 17], sizes = [8, 256], strides = [1, 1]} : vector<8x290xbf16> to vector<8x256xbf16>
    %159 = arith.extf %158 : vector<8x256xbf16> to vector<8x256xf32>
    %160 = arith.addf %157, %159 : vector<8x256xf32>
    %161 = vector.broadcast %7 : vector<8x1xf32> to vector<8x256xf32>
    %162 = arith.mulf %160, %161 : vector<8x256xf32>
    %163 = vector.broadcast %8 : vector<8x1xf32> to vector<8x256xf32>
    %164 = arith.addf %162, %163 : vector<8x256xf32>
    %165 = arith.negf %164 : vector<8x256xf32>
    %166 = math.exp %165 : vector<8x256xf32>
    %cst_55 = arith.constant 1.000000e+00 : f32
    %167 = vector.broadcast %cst_55 : f32 to vector<8x256xf32>
    %168 = arith.addf %167, %166 : vector<8x256xf32>
    %169 = arith.divf %167, %168 : vector<8x256xf32>
    %170 = arith.mulf %164, %169 : vector<8x256xf32>
    %c0_56 = arith.constant 0 : index
    %c0_57 = arith.constant 0 : index
    %c0_58 = arith.constant 0 : index
    %171 = vector.load %arg11[%c0_56, %c0_57, %c0_58] : memref<1x8x256xf32, #tpu.memory_space<vmem>>, vector<1x8x256xf32>
    %172 = vector.shape_cast %171 : vector<1x8x256xf32> to vector<8x256xf32>
    %173 = vector.shape_cast %170 : vector<8x256xf32> to vector<1x8x256xf32>
    tpu.vector_store %arg11[%c0_56, %c0_57, %c0_58], %173 {strides = array<i32>} : memref<1x8x256xf32, #tpu.memory_space<vmem>>, vector<1x8x256xf32>,
    return
  }
  func.func @transform_0(%arg0: i32) -> (i32, i32, i32) {
    %c0_i32 = arith.constant 0 : i32
    %c0_i32_0 = arith.constant 0 : i32
    %c0_i32_1 = arith.constant 0 : i32
    return %arg0, %c0_i32, %c0_i32_0 : i32, i32, i32
  }
  func.func @transform_1(%arg0: i32) -> (i32, i32, i32) {
    %c0_i32 = arith.constant 0 : i32
    %c0_i32_0 = arith.constant 0 : i32
    %c0_i32_1 = arith.constant 0 : i32
    %c0_i32_2 = arith.constant 0 : i32
    return %c0_i32, %c0_i32_0, %c0_i32_1 : i32, i32, i32
  }
  func.func @transform_2(%arg0: i32) -> (i32, i32, i32) {
    %c0_i32 = arith.constant 0 : i32
    %c0_i32_0 = arith.constant 0 : i32
    %c0_i32_1 = arith.constant 0 : i32
    %c0_i32_2 = arith.constant 0 : i32
    return %c0_i32, %c0_i32_0, %c0_i32_1 : i32, i32, i32
  }
  func.func @transform_3(%arg0: i32) -> (i32, i32) {
    %c0_i32 = arith.constant 0 : i32
    %c0_i32_0 = arith.constant 0 : i32
    %c0_i32_1 = arith.constant 0 : i32
    return %c0_i32, %c0_i32_0 : i32, i32
  }
  func.func @transform_4(%arg0: i32) -> (i32, i32) {
    %c0_i32 = arith.constant 0 : i32
    %c0_i32_0 = arith.constant 0 : i32
    %c0_i32_1 = arith.constant 0 : i32
    return %c0_i32, %c0_i32_0 : i32, i32
  }
  func.func @transform_5(%arg0: i32) -> (i32, i32) {
    %c0_i32 = arith.constant 0 : i32
    %c0_i32_0 = arith.constant 0 : i32
    %c0_i32_1 = arith.constant 0 : i32
    return %c0_i32, %c0_i32_0 : i32, i32
  }
  func.func @transform_6(%arg0: i32) -> (i32, i32) {
    %c0_i32 = arith.constant 0 : i32
    %c0_i32_0 = arith.constant 0 : i32
    %c0_i32_1 = arith.constant 0 : i32
    return %c0_i32, %c0_i32_0 : i32, i32
  }
  func.func @transform_7(%arg0: i32) -> (i32, i32) {
    %c0_i32 = arith.constant 0 : i32
    %c0_i32_0 = arith.constant 0 : i32
    %c0_i32_1 = arith.constant 0 : i32
    return %c0_i32, %c0_i32_0 : i32, i32
  }
  func.func @transform_8(%arg0: i32) -> (i32, i32) {
    %c0_i32 = arith.constant 0 : i32
    %c0_i32_0 = arith.constant 0 : i32
    %c0_i32_1 = arith.constant 0 : i32
    return %c0_i32, %c0_i32_0 : i32, i32
  }
  func.func @transform_9(%arg0: i32) -> (i32, i32) {
    %c0_i32 = arith.constant 0 : i32
    %c0_i32_0 = arith.constant 0 : i32
    %c0_i32_1 = arith.constant 0 : i32
    return %c0_i32, %c0_i32_0 : i32, i32
  }
  func.func @transform_10(%arg0: i32) -> (i32, i32, i32) {
    %c0_i32 = arith.constant 0 : i32
    %c0_i32_0 = arith.constant 0 : i32
    %c0_i32_1 = arith.constant 0 : i32
    return %arg0, %c0_i32, %c0_i32_0 : i32, i32, i32
  }
}

</mosaic_0001>

<llo_original>
// kernel: resblock_forward.1
$region0: #{resblock_forward.1}
  #allocation0 [shape = 'u32[]', space=smem, size = 0x4, offset = 0x4, fixed_abs, tag = 'smem constant byte address 0x4 - core index']
  #allocation1 [shape = 'u32[144,128]{1,0:T(1,128)}', space=vmem, size = 0x12000, scoped, tag = 'internal scratch']
  #allocation2 [shape = 'bf16[8,290]{1,0:T(8,128)(2,1)}', space=vmem, size = 0x1800, scoped, tag = 'scratch operand']
  %s0 = inlined_call_operand.vmem [shape: bf16[2,8,290], index: 0, kind: input, shape index: {}]
  %s1 = inlined_call_operand.vmem [shape: bf16[9,8,8], index: 1, kind: input, shape index: {}]
  %s2 = inlined_call_operand.vmem [shape: bf16[9,8,8], index: 2, kind: input, shape index: {}]
  %s3 = inlined_call_operand.vmem [shape: f32[8,1], index: 3, kind: input, shape index: {}]
  %s4 = inlined_call_operand.vmem [shape: f32[8,1], index: 4, kind: input, shape index: {}]
  %s5 = inlined_call_operand.vmem [shape: f32[8,1], index: 5, kind: input, shape index: {}]
  %s6 = inlined_call_operand.vmem [shape: f32[8,1], index: 6, kind: input, shape index: {}]
  %s7 = inlined_call_operand.vmem [shape: f32[8,1], index: 7, kind: input, shape index: {}]
  %s8 = inlined_call_operand.vmem [shape: f32[8,1], index: 8, kind: input, shape index: {}]
  %s9 = inlined_call_operand.vmem [shape: f32[3,256], index: 9, kind: input, shape index: {}]
  %s10 = inlined_call_operand.vmem [shape: f32[2,8,256], index: 10, kind: output, shape index: {}]
  %s11 = sld [smem:[#allocation0]]
  $region73: #{resblock_forward.1} parent=0
    _
  %s13 = ssub.s32 1, %s11
  %s14 = scalar_select 0, %s13, %s11
  loop: start=0, step=1, limit=4
  $region2: #{resblock_forward.1} parent=0 // loop_pre_header
    _
  $region3: #{resblock_forward.1} parent=0 // loop_header
    %s16 = sphi 0, %s20
    %p17 = scmp.ge.s32.totalorder %s16, 4
    %s26 = sphi 0, %s28
    %s29 = sphi 0, %s26
    %s30 = sphi 0, %s29
    %s46 = sphi 0, %s30
    %s50 = sphi 0, %s50
    %s52 = sphi 0, %s50
    %s53 = sphi 0, %s52
    %s67 = sphi 0, %s53
    %s71 = sphi 0, %s71
    %s73 = sphi 0, %s71
    %s74 = sphi 0, %s73
    %s88 = sphi 0, %s74
    %s92 = sphi 0, %s92
    %s94 = sphi 0, %s92
    %s95 = sphi 0, %s94
    %s109 = sphi 0, %s95
    %s113 = sphi 0, %s113
    %s115 = sphi 0, %s113
    %s116 = sphi 0, %s115
    %s130 = sphi 0, %s116
    %s134 = sphi 0, %s134
    %s136 = sphi 0, %s134
    %s137 = sphi 0, %s136
    %s151 = sphi 0, %s137
    %s155 = sphi 0, %s155
    %s157 = sphi 0, %s155
    %s158 = sphi 0, %s157
    %s172 = sphi 0, %s158
    %s176 = sphi 0, %s176
    %s178 = sphi 0, %s176
    %s179 = sphi 0, %s178
    %s193 = sphi 0, %s179
    %s197 = sphi 0, %s197
    %s199 = sphi 0, %s197
    %s200 = sphi 0, %s199
    %s214 = sphi 0, %s200
    %s218 = sphi 0, %s218
    %s220 = sphi 0, %s218
    %s221 = sphi 0, %s220
    %s235 = sphi 0, %s221
    %s241 = sphi 0, %s243
    %s244 = sphi 0, %s241
    %s245 = sphi 0, %s244
    %s261 = sphi 0, %s245
  $region4: #{resblock_forward.1} parent=0 // loop_header_branch
    %19 = sbr.rel (%p17) target = $region8
  $region5: #{resblock_forward.1} parent=0 // loop_body
    %s21 = ssub.s32 %s16, 1
    %s22 = ssub.s32 %s16, 2
    %s23 = sadd.s32 %s16, 1
    %s24 = ssub.s32 %s16, %s23
    %p25 = scmp.eq.s32.totalorder %s24, 0
    %s27 = sadd.s32 %s26, 1
    %s28 = scalar_select %p25, %s26, %s27
    %p31 = pneg %p25
    %p32 = scmp.eq.s32.totalorder %s16, 1
    %p33 = por %p31, %p32
    %p34 = scmp.ne.s32.totalorder %s26, %s29
    %p35 = scmp.eq.s32.totalorder %s16, 0
    %p36 = por %p34, %p35
    %p37 = scmp.ne.s32.totalorder %s26, %s29
    %p38 = scmp.eq.s32.totalorder %s21, 1
    %p39 = por %p37, %p38
    %p40 = scmp.ne.s32.totalorder %s29, %s30
    %p41 = scmp.eq.s32.totalorder %s21, 0
    %p42 = por %p40, %p41
    %p43 = scmp.ne.s32.totalorder %s29, %s30
    %p44 = scmp.eq.s32.totalorder %s22, 1
    %p45 = por %p43, %p44
    %p47 = scmp.ne.s32.totalorder %s30, %s46
    %p48 = scmp.eq.s32.totalorder %s22, 0
    %p49 = por %p47, %p48
    %s51 = sadd.s32 %s50, 1
    %p54 = scmp.eq.s32.totalorder %s16, 1
    %p55 = scmp.ne.s32.totalorder %s50, %s52
    %p56 = scmp.eq.s32.totalorder %s16, 0
    %p57 = por %p55, %p56
    %p58 = scmp.ne.s32.totalorder %s50, %s52
    %p59 = scmp.eq.s32.totalorder %s21, 1
    %p60 = por %p58, %p59
    %p61 = scmp.ne.s32.totalorder %s52, %s53
    %p62 = scmp.eq.s32.totalorder %s21, 0
    %p63 = por %p61, %p62
    %p64 = scmp.ne.s32.totalorder %s52, %s53
    %p65 = scmp.eq.s32.totalorder %s22, 1
    %p66 = por %p64, %p65
    %p68 = scmp.ne.s32.totalorder %s53, %s67
    %p69 = scmp.eq.s32.totalorder %s22, 0
    %p70 = por %p68, %p69
    %s72 = sadd.s32 %s71, 1
    %p75 = scmp.eq.s32.totalorder %s16, 1
    %p76 = scmp.ne.s32.totalorder %s71, %s73
    %p77 = scmp.eq.s32.totalorder %s16, 0
    %p78 = por %p76, %p77
    %p79 = scmp.ne.s32.totalorder %s71, %s73
    %p80 = scmp.eq.s32.totalorder %s21, 1
    %p81 = por %p79, %p80
    %p82 = scmp.ne.s32.totalorder %s73, %s74
    %p83 = scmp.eq.s32.totalorder %s21, 0
    %p84 = por %p82, %p83
    %p85 = scmp.ne.s32.totalorder %s73, %s74
    %p86 = scmp.eq.s32.totalorder %s22, 1
    %p87 = por %p85, %p86
    %p89 = scmp.ne.s32.totalorder %s74, %s88
    %p90 = scmp.eq.s32.totalorder %s22, 0
    %p91 = por %p89, %p90
    %s93 = sadd.s32 %s92, 1
    %p96 = scmp.eq.s32.totalorder %s16, 1
    %p97 = scmp.ne.s32.totalorder %s92, %s94
    %p98 = scmp.eq.s32.totalorder %s16, 0
    %p99 = por %p97, %p98
    %p100 = scmp.ne.s32.totalorder %s92, %s94
    %p101 = scmp.eq.s32.totalorder %s21, 1
    %p102 = por %p100, %p101
    %p103 = scmp.ne.s32.totalorder %s94, %s95
    %p104 = scmp.eq.s32.totalorder %s21, 0
    %p105 = por %p103, %p104
    %p106 = scmp.ne.s32.totalorder %s94, %s95
    %p107 = scmp.eq.s32.totalorder %s22, 1
    %p108 = por %p106, %p107
    %p110 = scmp.ne.s32.totalorder %s95, %s109
    %p111 = scmp.eq.s32.totalorder %s22, 0
    %p112 = por %p110, %p111
    %s114 = sadd.s32 %s113, 1
    %p117 = scmp.eq.s32.totalorder %s16, 1
    %p118 = scmp.ne.s32.totalorder %s113, %s115
    %p119 = scmp.eq.s32.totalorder %s16, 0
    %p120 = por %p118, %p119
    %p121 = scmp.ne.s32.totalorder %s113, %s115
    %p122 = scmp.eq.s32.totalorder %s21, 1
    %p123 = por %p121, %p122
    %p124 = scmp.ne.s32.totalorder %s115, %s116
    %p125 = scmp.eq.s32.totalorder %s21, 0
    %p126 = por %p124, %p125
    %p127 = scmp.ne.s32.totalorder %s115, %s116
    %p128 = scmp.eq.s32.totalorder %s22, 1
    %p129 = por %p127, %p128
    %p131 = scmp.ne.s32.totalorder %s116, %s130
    %p132 = scmp.eq.s32.totalorder %s22, 0
    %p133 = por %p131, %p132
    %s135 = sadd.s32 %s134, 1
    %p138 = scmp.eq.s32.totalorder %s16, 1
    %p139 = scmp.ne.s32.totalorder %s134, %s136
    %p140 = scmp.eq.s32.totalorder %s16, 0
    %p141 = por %p139, %p140
    %p142 = scmp.ne.s32.totalorder %s134, %s136
    %p143 = scmp.eq.s32.totalorder %s21, 1
    %p144 = por %p142, %p143
    %p145 = scmp.ne.s32.totalorder %s136, %s137
    %p146 = scmp.eq.s32.totalorder %s21, 0
    %p147 = por %p145, %p146
    %p148 = scmp.ne.s32.totalorder %s136, %s137
    %p149 = scmp.eq.s32.totalorder %s22, 1
    %p150 = por %p148, %p149
    %p152 = scmp.ne.s32.totalorder %s137, %s151
    %p153 = scmp.eq.s32.totalorder %s22, 0
    %p154 = por %p152, %p153
    %s156 = sadd.s32 %s155, 1
    %p159 = scmp.eq.s32.totalorder %s16, 1
    %p160 = scmp.ne.s32.totalorder %s155, %s157
    %p161 = scmp.eq.s32.totalorder %s16, 0
    %p162 = por %p160, %p161
    %p163 = scmp.ne.s32.totalorder %s155, %s157
    %p164 = scmp.eq.s32.totalorder %s21, 1
    %p165 = por %p163, %p164
    %p166 = scmp.ne.s32.totalorder %s157, %s158
    %p167 = scmp.eq.s32.totalorder %s21, 0
    %p168 = por %p166, %p167
    %p169 = scmp.ne.s32.totalorder %s157, %s158
    %p170 = scmp.eq.s32.totalorder %s22, 1
    %p171 = por %p169, %p170
    %p173 = scmp.ne.s32.totalorder %s158, %s172
    %p174 = scmp.eq.s32.totalorder %s22, 0
    %p175 = por %p173, %p174
    %s177 = sadd.s32 %s176, 1
    %p180 = scmp.eq.s32.totalorder %s16, 1
    %p181 = scmp.ne.s32.totalorder %s176, %s178
    %p182 = scmp.eq.s32.totalorder %s16, 0
    %p183 = por %p181, %p182
    %p184 = scmp.ne.s32.totalorder %s176, %s178
    %p185 = scmp.eq.s32.totalorder %s21, 1
    %p186 = por %p184, %p185
    %p187 = scmp.ne.s32.totalorder %s178, %s179
    %p188 = scmp.eq.s32.totalorder %s21, 0
    %p189 = por %p187, %p188
    %p190 = scmp.ne.s32.totalorder %s178, %s179
    %p191 = scmp.eq.s32.totalorder %s22, 1
    %p192 = por %p190, %p191
    %p194 = scmp.ne.s32.totalorder %s179, %s193
    %p195 = scmp.eq.s32.totalorder %s22, 0
    %p196 = por %p194, %p195
    %s198 = sadd.s32 %s197, 1
    %p201 = scmp.eq.s32.totalorder %s16, 1
    %p202 = scmp.ne.s32.totalorder %s197, %s199
    %p203 = scmp.eq.s32.totalorder %s16, 0
    %p204 = por %p202, %p203
    %p205 = scmp.ne.s32.totalorder %s197, %s199
    %p206 = scmp.eq.s32.totalorder %s21, 1
    %p207 = por %p205, %p206
    %p208 = scmp.ne.s32.totalorder %s199, %s200
    %p209 = scmp.eq.s32.totalorder %s21, 0
    %p210 = por %p208, %p209
    %p211 = scmp.ne.s32.totalorder %s199, %s200
    %p212 = scmp.eq.s32.totalorder %s22, 1
    %p213 = por %p211, %p212
    %p215 = scmp.ne.s32.totalorder %s200, %s214
    %p216 = scmp.eq.s32.totalorder %s22, 0
    %p217 = por %p215, %p216
    %s219 = sadd.s32 %s218, 1
    %p222 = scmp.eq.s32.totalorder %s16, 1
    %p223 = scmp.ne.s32.totalorder %s218, %s220
    %p224 = scmp.eq.s32.totalorder %s16, 0
    %p225 = por %p223, %p224
    %p226 = scmp.ne.s32.totalorder %s218, %s220
    %p227 = scmp.eq.s32.totalorder %s21, 1
    %p228 = por %p226, %p227
    %p229 = scmp.ne.s32.totalorder %s220, %s221
    %p230 = scmp.eq.s32.totalorder %s21, 0
    %p231 = por %p229, %p230
    %p232 = scmp.ne.s32.totalorder %s220, %s221
    %p233 = scmp.eq.s32.totalorder %s22, 1
    %p234 = por %p232, %p233
    %p236 = scmp.ne.s32.totalorder %s221, %s235
    %p237 = scmp.eq.s32.totalorder %s22, 0
    %p238 = por %p236, %p237
    %s239 = ssub.s32 %s16, %s23
    %p240 = scmp.eq.s32.totalorder %s239, 0
    %s242 = sadd.s32 %s241, 1
    %s243 = scalar_select %p240, %s241, %s242
    %p246 = pneg %p240
    %p247 = scmp.eq.s32.totalorder %s16, 1
    %p248 = por %p246, %p247
    %p249 = scmp.ne.s32.totalorder %s241, %s244
    %p250 = scmp.eq.s32.totalorder %s16, 0
    %p251 = por %p249, %p250
    %p252 = scmp.ne.s32.totalorder %s241, %s244
    %p253 = scmp.eq.s32.totalorder %s21, 1
    %p254 = por %p252, %p253
    %p255 = scmp.ne.s32.totalorder %s244, %s245
    %p256 = scmp.eq.s32.totalorder %s21, 0
    %p257 = por %p255, %p256
    %p258 = scmp.ne.s32.totalorder %s244, %s245
    %p259 = scmp.eq.s32.totalorder %s22, 1
    %p260 = por %p258, %p259
    %p262 = scmp.ne.s32.totalorder %s245, %s261
    %p263 = scmp.eq.s32.totalorder %s22, 0
    %p264 = por %p262, %p263
    %p265 = scmp.le.s32.totalorder 1, %s16
    %p266 = scmp.lt.s32.totalorder %s16, 3
    %p267 = pnand %p265, %p266
    %p268 = pneg %p267
    // Predicated region
    $region9: #{resblock_forward.1} parent=5 // pred_check
      _
    $region10: #{resblock_forward.1} parent=5 // pred_check_branch
      %270 = sbr.rel (%p267) target = $region12
    $region11: #{resblock_forward.1} parent=5 // pred_region
      %s271 = ssub.s32 %s16, 1
      // Predicated region
      $region13: #{resblock_forward.1} parent=11 // pred_check
        %p272 = pneg %p63
      $region14: #{resblock_forward.1} parent=11 // pred_check_branch
        %274 = sbr.rel (%p272) target = $region16
      $region15: #{resblock_forward.1} parent=11 // pred_region
        _
      $region16: #{resblock_forward.1} parent=11 // pred_fallthru
        _
      // Predicated region
      $region17: #{resblock_forward.1} parent=11 // pred_check
        %p275 = pneg %p84
      $region18: #{resblock_forward.1} parent=11 // pred_check_branch
        %277 = sbr.rel (%p275) target = $region20
      $region19: #{resblock_forward.1} parent=11 // pred_region
        _
      $region20: #{resblock_forward.1} parent=11 // pred_fallthru
        _
      // Predicated region
      $region21: #{resblock_forward.1} parent=11 // pred_check
        %p278 = pneg %p105
      $region22: #{resblock_forward.1} parent=11 // pred_check_branch
        %280 = sbr.rel (%p278) target = $region24
      $region23: #{resblock_forward.1} parent=11 // pred_region
        _
      $region24: #{resblock_forward.1} parent=11 // pred_fallthru
        _
      // Predicated region
      $region25: #{resblock_forward.1} parent=11 // pred_check
        %p281 = pneg %p126
      $region26: #{resblock_forward.1} parent=11 // pred_check_branch
        %283 = sbr.rel (%p281) target = $region28
      $region27: #{resblock_forward.1} parent=11 // pred_region
        _
      $region28: #{resblock_forward.1} parent=11 // pred_fallthru
        _
      // Predicated region
      $region29: #{resblock_forward.1} parent=11 // pred_check
        %p284 = pneg %p147
      $region30: #{resblock_forward.1} parent=11 // pred_check_branch
        %286 = sbr.rel (%p284) target = $region32
      $region31: #{resblock_forward.1} parent=11 // pred_region
        _
      $region32: #{resblock_forward.1} parent=11 // pred_fallthru
        _
      // Predicated region
      $region33: #{resblock_forward.1} parent=11 // pred_check
        %p287 = pneg %p168
      $region34: #{resblock_forward.1} parent=11 // pred_check_branch
        %289 = sbr.rel (%p287) target = $region36
      $region35: #{resblock_forward.1} parent=11 // pred_region
        _
      $region36: #{resblock_forward.1} parent=11 // pred_fallthru
        _
      // Predicated region
      $region37: #{resblock_forward.1} parent=11 // pred_check
        %p290 = pneg %p189
      $region38: #{resblock_forward.1} parent=11 // pred_check_branch
        %292 = sbr.rel (%p290) target = $region40
      $region39: #{resblock_forward.1} parent=11 // pred_region
        _
      $region40: #{resblock_forward.1} parent=11 // pred_fallthru
        _
      // Predicated region
      $region41: #{resblock_forward.1} parent=11 // pred_check
        %p293 = pneg %p210
      $region42: #{resblock_forward.1} parent=11 // pred_check_branch
        %295 = sbr.rel (%p293) target = $region44
      $region43: #{resblock_forward.1} parent=11 // pred_region
        _
      $region44: #{resblock_forward.1} parent=11 // pred_fallthru
        _
      // Predicated region
      $region45: #{resblock_forward.1} parent=11 // pred_check
        %p296 = pneg %p231
      $region46: #{resblock_forward.1} parent=11 // pred_check_branch
        %298 = sbr.rel (%p296) target = $region48
      $region47: #{resblock_forward.1} parent=11 // pred_region
        _
      $region48: #{resblock_forward.1} parent=11 // pred_fallthru
        _
    $region12: #{resblock_forward.1} parent=5 // pred_fallthru
      _
    %p299 = scmp.lt.s32.totalorder %s16, 2
    // Predicated region
    $region49: #{resblock_forward.1} parent=5 // pred_check
      %p300 = pneg %p299
    $region50: #{resblock_forward.1} parent=5 // pred_check_branch
      %302 = sbr.rel (%p300) target = $region52
    $region51: #{resblock_forward.1} parent=5 // pred_region
      // Predicated region
      $region53: #{resblock_forward.1} parent=51 // pred_check
        %p303 = pneg %p36
      $region54: #{resblock_forward.1} parent=51 // pred_check_branch
        %305 = sbr.rel (%p303) target = $region56
      $region55: #{resblock_forward.1} parent=51 // pred_region
        %p306 = scmp.lt.s32.totalorder %s16, 1
        %s307 = scalar_select %p306, %s16, 1
        %s308 = smul.addr %s307, 3
        %s309 = smul.addr %s308, 4
        %s310 = scalar_lea.vmem %s0, %s309
      $region56: #{resblock_forward.1} parent=51 // pred_fallthru
        _
    $region52: #{resblock_forward.1} parent=5 // pred_fallthru
      _
    %p311 = scmp.le.s32.totalorder 1, %s16
    %p312 = scmp.lt.s32.totalorder %s16, 3
    %p313 = pnand %p311, %p312
    %p314 = pneg %p313
    // Predicated region
    $region57: #{resblock_forward.1} parent=5 // pred_check
      _
    $region58: #{resblock_forward.1} parent=5 // pred_check_branch
      %316 = sbr.rel (%p313) target = $region60
    $region59: #{resblock_forward.1} parent=5 // pred_region
      %s317 = ssub.s32 %s16, 1
      %p318 = scmp.lt.s32.totalorder %s21, 1
      %s319 = scalar_select %p318, %s21, 1
      %s320 = smul.addr %s319, 3
      %s321 = smul.addr %s320, 4
      %s322 = scalar_lea.vmem %s0, %s321
      %p323 = pneg %p42
      %p324 = pneg %p39
      %p325 = pneg %p63
      %p326 = pneg %p60
      %p327 = pneg %p84
      %p328 = pneg %p81
      %p329 = pneg %p105
      %p330 = pneg %p102
      %p331 = pneg %p126
      %p332 = pneg %p123
      %p333 = pneg %p147
      %p334 = pneg %p144
      %p335 = pneg %p168
      %p336 = pneg %p165
      %p337 = pneg %p189
      %p338 = pneg %p186
      %p339 = pneg %p210
      %p340 = pneg %p207
      %p341 = pneg %p231
      %p342 = pneg %p228
      %p343 = pneg %p257
      %p344 = pneg %p254
      %p345 = scmp.lt.s32.totalorder %s21, 1
      %s346 = scalar_select %p345, %s21, 1
      %s347 = smul.addr %s346, 2
      %s348 = smul.addr %s347, 8
      %s349 = scalar_lea.vmem %s10, %s348
      %p350 = scmp.lt.s32.totalorder %s21, 1
      %s351 = scalar_select %p350, %s21, 1
      %s352 = smul.addr %s351, 3
      %s353 = smul.addr %s352, 4
      %s354 = scalar_lea.vmem %s0, %s353
      %p355 = scmp.lt.s32.totalorder %s21, 1
      %s356 = scalar_select %p355, %s21, 1
      %s357 = smul.addr %s356, 2
      %s358 = smul.addr %s357, 8
      %s359 = scalar_lea.vmem %s10, %s358
      %v361 = vld [vmem:[%s354] sm:$0xff]
      %v362 = vld [vmem:[%s354 + $0x8] sm:$0xf]
      %v363 = vld [vmem:[%s9] sm:$0x77]
      %v364 = vld [vmem:[%s3] sm:$0xff]
      %v365 = vld [vmem:[%s4] sm:$0xff]
      %v366 = vld [vmem:[%s5] sm:$0xff]
      %v367 = vld [vmem:[%s6] sm:$0xff]
      %v368 = vld [vmem:[%s7] sm:$0xff]
      %v369 = vld [vmem:[%s8] sm:$0xff]
      %v370 = vld [vmem:[%s1] sm:$0xf]
      %v371 = vld [vmem:[%s1 + $0x4] sm:$0xf]
      %v372 = vld [vmem:[%s1 + $0x8] sm:$0xf]
      %v373 = vld [vmem:[%s1 + $0xc] sm:$0xf]
      %v374 = vld [vmem:[%s1 + $0x10] sm:$0xf]
      %v375 = vld [vmem:[%s1 + $0x14] sm:$0xf]
      %v376 = vld [vmem:[%s1 + $0x18] sm:$0xf]
      %v377 = vld [vmem:[%s1 + $0x1c] sm:$0xf]
      %v378 = vld [vmem:[%s1 + $0x20] sm:$0xf]
      %v379 = vld [vmem:[%s2] sm:$0xf]
      %v380 = vld [vmem:[%s2 + $0x4] sm:$0xf]
      %v381 = vld [vmem:[%s2 + $0x8] sm:$0xf]
      %v382 = vld [vmem:[%s2 + $0xc] sm:$0xf]
      %v383 = vld [vmem:[%s2 + $0x10] sm:$0xf]
      %v384 = vld [vmem:[%s2 + $0x14] sm:$0xf]
      %v385 = vld [vmem:[%s2 + $0x18] sm:$0xf]
      %v386 = vld [vmem:[%s2 + $0x1c] sm:$0xf]
      %v387 = vld [vmem:[%s2 + $0x20] sm:$0xf]
      %v390 = vunpack.c.l.b16 %v361
      %v391 = vunpack.c.h.b16 %v361
      %v392 = vunpack.c.l.b16 %v362
      %v393 = vpack.c.b16 %v390, %v390
      %v394 = vpack.c.b16 %v391, %v391
      %v395 = vpack.c.b16 %v392, %v392
      %396 = vrot.lane.b32.xlu0 %v393, 112
      %v397 = vpop.permute.xlu0 %396
      %398 = vrot.lane.b32.xlu0 %v394, 112
      %v399 = vpop.permute.xlu0 %398
      %400 = vrot.lane.b32.xlu0 %v395, 112
      %v401 = vpop.permute.xlu0 %400
      %vm402 = vcmask 916480
      %v403 = vsel %vm402, %v397, %v399
      %v404 = vsel %vm402, %v399, %v401
      %vm405 = vcmask 64512
      %v407 = vsel %vm405, %v373, 0
      %vm409 = vcmask 1043456
      %v411 = vsel %vm409, %v403, 0
      %v414 = vsel %vm409, %v404, 0
      %416 = vmatprep.subr.bf16.mxu0 0
      %417 = vmatpush1.bf16.msra.mxu0 0
      %418 = vmatprep.subr.bf16.mxu0 0
      %419 = vmatpush1.bf16.msra.mxu0 0
      %420 = vmatprep.subr.bf16.mxu0 0
      %421 = vmatpush1.bf16.msra.mxu0 0
      %422 = vmatprep.subr.bf16.mxu0 0
      %423 = vmatpush1.bf16.msra.mxu0 0
      %424 = vmatprep.subr.bf16.mxu0 0
      %425 = vmatpush1.bf16.msra.mxu0 0
      %426 = vmatprep.subr.bf16.mxu0 0
      %427 = vmatpush1.bf16.msra.mxu0 0
      %428 = vmatprep.subr.bf16.mxu0 0
      %429 = vmatpush1.bf16.msra.mxu0 0
      %430 = vmatprep.subr.bf16.mxu0 %v414
      %431 = vmatpush1.bf16.msra.mxu0 %v411
      %432 = vmatprep.subr.bf16.mxu0 0
      %433 = vmatpush2.bf16.msra.mxu0 0
      %434 = vmatprep.subr.bf16.mxu0 0
      %435 = vmatpush2.bf16.msra.mxu0 0
      %436 = vmatprep.subr.bf16.mxu0 0
      %437 = vmatpush2.bf16.msra.mxu0 0
      %438 = vmatprep.subr.bf16.mxu0 0
      %439 = vmatpush2.bf16.msra.mxu0 0
      %440 = vmatprep.subr.bf16.mxu0 0
      %441 = vmatpush2.bf16.msra.mxu0 0
      %442 = vmatprep.subr.bf16.mxu0 0
      %443 = vmatpush2.bf16.msra.mxu0 0
      %444 = vmatprep.subr.bf16.mxu0 0
      %445 = vmatpush2.bf16.msra.mxu0 0
      %446 = vmatprep.subr.bf16.mxu0 0
      %447 = vmatpush2.bf16.msra.mxu0 0
      %448 = vmatprep.mubr.bf16.mxu0 0
      %449 = vmatmul.mubr.bf16.gmra.mxu0 %v407
      %v450 = vpop.f32.mrf.mxu0
      %v451 = vadd.f32 0.0, %v450
      %v452 = vpop.f32.mrf.mxu0
      %v453 = vadd.f32 0.0, %v452
      %v454 = vpop.f32.mrf.mxu0
      %v455 = vpop.f32.mrf.mxu0
      %456 = vdwg.mxu0
      %v458 = vsel %vm405, %v370, 0
      %v461 = vsel %vm409, %v393, 0
      %v464 = vsel %vm409, %v394, 0
      %466 = vmatprep.subr.bf16.mxu0 0
      %467 = vmatpush1.bf16.msra.mxu0 0
      %468 = vmatprep.subr.bf16.mxu0 0
      %469 = vmatpush1.bf16.msra.mxu0 0
      %470 = vmatprep.subr.bf16.mxu0 0
      %471 = vmatpush1.bf16.msra.mxu0 0
      %472 = vmatprep.subr.bf16.mxu0 0
      %473 = vmatpush1.bf16.msra.mxu0 0
      %474 = vmatprep.subr.bf16.mxu0 0
      %475 = vmatpush1.bf16.msra.mxu0 0
      %476 = vmatprep.subr.bf16.mxu0 0
      %477 = vmatpush1.bf16.msra.mxu0 0
      %478 = vmatprep.subr.bf16.mxu0 0
      %479 = vmatpush1.bf16.msra.mxu0 0
      %480 = vmatprep.subr.bf16.mxu0 %v464
      %481 = vmatpush1.bf16.msra.mxu0 %v461
      %482 = vmatprep.subr.bf16.mxu0 0
      %483 = vmatpush2.bf16.msra.mxu0 0
      %484 = vmatprep.subr.bf16.mxu0 0
      %485 = vmatpush2.bf16.msra.mxu0 0
      %486 = vmatprep.subr.bf16.mxu0 0
      %487 = vmatpush2.bf16.msra.mxu0 0
      %488 = vmatprep.subr.bf16.mxu0 0
      %489 = vmatpush2.bf16.msra.mxu0 0
      %490 = vmatprep.subr.bf16.mxu0 0
      %491 = vmatpush2.bf16.msra.mxu0 0
      %492 = vmatprep.subr.bf16.mxu0 0
      %493 = vmatpush2.bf16.msra.mxu0 0
      %494 = vmatprep.subr.bf16.mxu0 0
      %495 = vmatpush2.bf16.msra.mxu0 0
      %496 = vmatprep.subr.bf16.mxu0 0
      %497 = vmatpush2.bf16.msra.mxu0 0
      %498 = vmatprep.mubr.bf16.mxu0 0
      %499 = vmatmul.mubr.bf16.gmra.mxu0 %v458
      %v500 = vpop.f32.mrf.mxu0
      %v501 = vadd.f32 %v451, %v500
      %v502 = vpop.f32.mrf.mxu0
      %v503 = vadd.f32 %v453, %v502
      %v504 = vpop.f32.mrf.mxu0
      %v505 = vpop.f32.mrf.mxu0
      %506 = vdwg.mxu0
      %507 = vrot.lane.b32.xlu0 %v393, 96
      %v508 = vpop.permute.xlu0 %507
      %509 = vrot.lane.b32.xlu0 %v394, 96
      %v510 = vpop.permute.xlu0 %509
      %511 = vrot.lane.b32.xlu0 %v395, 96
      %v512 = vpop.permute.xlu0 %511
      %vm513 = vcmask 785408
      %v514 = vsel %vm513, %v508, %v510
      %v515 = vsel %vm513, %v510, %v512
      %v517 = vsel %vm405, %v376, 0
      %v520 = vsel %vm409, %v514, 0
      %v523 = vsel %vm409, %v515, 0
      %525 = vmatprep.subr.bf16.mxu0 0
      %526 = vmatpush1.bf16.msra.mxu0 0
      %527 = vmatprep.subr.bf16.mxu0 0
      %528 = vmatpush1.bf16.msra.mxu0 0
      %529 = vmatprep.subr.bf16.mxu0 0
      %530 = vmatpush1.bf16.msra.mxu0 0
      %531 = vmatprep.subr.bf16.mxu0 0
      %532 = vmatpush1.bf16.msra.mxu0 0
      %533 = vmatprep.subr.bf16.mxu0 0
      %534 = vmatpush1.bf16.msra.mxu0 0
      %535 = vmatprep.subr.bf16.mxu0 0
      %536 = vmatpush1.bf16.msra.mxu0 0
      %537 = vmatprep.subr.bf16.mxu0 0
      %538 = vmatpush1.bf16.msra.mxu0 0
      %539 = vmatprep.subr.bf16.mxu0 %v523
      %540 = vmatpush1.bf16.msra.mxu0 %v520
      %541 = vmatprep.subr.bf16.mxu0 0
      %542 = vmatpush2.bf16.msra.mxu0 0
      %543 = vmatprep.subr.bf16.mxu0 0
      %544 = vmatpush2.bf16.msra.mxu0 0
      %545 = vmatprep.subr.bf16.mxu0 0
      %546 = vmatpush2.bf16.msra.mxu0 0
      %547 = vmatprep.subr.bf16.mxu0 0
      %548 = vmatpush2.bf16.msra.mxu0 0
      %549 = vmatprep.subr.bf16.mxu0 0
      %550 = vmatpush2.bf16.msra.mxu0 0
      %551 = vmatprep.subr.bf16.mxu0 0
      %552 = vmatpush2.bf16.msra.mxu0 0
      %553 = vmatprep.subr.bf16.mxu0 0
      %554 = vmatpush2.bf16.msra.mxu0 0
      %555 = vmatprep.subr.bf16.mxu0 0
      %556 = vmatpush2.bf16.msra.mxu0 0
      %557 = vmatprep.mubr.bf16.mxu0 0
      %558 = vmatmul.mubr.bf16.gmra.mxu0 %v517
      %v559 = vpop.f32.mrf.mxu0
      %v560 = vadd.f32 0.0, %v559
      %v561 = vpop.f32.mrf.mxu0
      %v562 = vadd.f32 0.0, %v561
      %v563 = vpop.f32.mrf.mxu0
      %v564 = vpop.f32.mrf.mxu0
      %565 = vdwg.mxu0
      %v566 = vadd.f32 %v501, %v560
      %v567 = vadd.f32 %v503, %v562
      %v569 = vlaneseq
      %v570 = vshrl.u32 %v569, 7
      %v571 = vsub.s32 0, %v570
      %v572 = vrot.slane %v363, %v571
      %v573 = vlaneseq
      %v574 = vshrl.u32 %v573, 7
      %v575 = vsub.s32 4, %v574
      %v576 = vrot.slane %v363, %v575
      %v579 = vlaneseq
      %v580 = vshrl.u32 %v579, 7
      %v581 = vsub.s32 0, %v580
      %v582 = vrot.slane %v572, %v581
      %v583 = vlaneseq
      %v584 = vshrl.u32 %v583, 7
      %v585 = vsub.s32 0, %v584
      %v586 = vrot.slane %v576, %v585
      %v587 = vmul.f32 %v566, %v582
      %v588 = vmul.f32 %v567, %v586
      %v589 = vadd.f32 %v587, 0.0
      %v590 = vadd.f32 %v588, 0.0
      %591 = vrot.lane.b32.xlu0 %v393, 111
      %v592 = vpop.permute.xlu0 %591
      %593 = vrot.lane.b32.xlu0 %v394, 111
      %v594 = vpop.permute.xlu0 %593
      %595 = vrot.lane.b32.xlu0 %v395, 111
      %v596 = vpop.permute.xlu0 %595
      %vm597 = vcmask 908288
      %v598 = vsel %vm597, %v592, %v594
      %v599 = vsel %vm597, %v594, %v596
      %v601 = vsel %vm405, %v374, 0
      %v604 = vsel %vm409, %v598, 0
      %v607 = vsel %vm409, %v599, 0
      %609 = vmatprep.subr.bf16.mxu0 0
      %610 = vmatpush1.bf16.msra.mxu0 0
      %611 = vmatprep.subr.bf16.mxu0 0
      %612 = vmatpush1.bf16.msra.mxu0 0
      %613 = vmatprep.subr.bf16.mxu0 0
      %614 = vmatpush1.bf16.msra.mxu0 0
      %615 = vmatprep.subr.bf16.mxu0 0
      %616 = vmatpush1.bf16.msra.mxu0 0
      %617 = vmatprep.subr.bf16.mxu0 0
      %618 = vmatpush1.bf16.msra.mxu0 0
      %619 = vmatprep.subr.bf16.mxu0 0
      %620 = vmatpush1.bf16.msra.mxu0 0
      %621 = vmatprep.subr.bf16.mxu0 0
      %622 = vmatpush1.bf16.msra.mxu0 0
      %623 = vmatprep.subr.bf16.mxu0 %v607
      %624 = vmatpush1.bf16.msra.mxu0 %v604
      %625 = vmatprep.subr.bf16.mxu0 0
      %626 = vmatpush2.bf16.msra.mxu0 0
      %627 = vmatprep.subr.bf16.mxu0 0
      %628 = vmatpush2.bf16.msra.mxu0 0
      %629 = vmatprep.subr.bf16.mxu0 0
      %630 = vmatpush2.bf16.msra.mxu0 0
      %631 = vmatprep.subr.bf16.mxu0 0
      %632 = vmatpush2.bf16.msra.mxu0 0
      %633 = vmatprep.subr.bf16.mxu0 0
      %634 = vmatpush2.bf16.msra.mxu0 0
      %635 = vmatprep.subr.bf16.mxu0 0
      %636 = vmatpush2.bf16.msra.mxu0 0
      %637 = vmatprep.subr.bf16.mxu0 0
      %638 = vmatpush2.bf16.msra.mxu0 0
      %639 = vmatprep.subr.bf16.mxu0 0
      %640 = vmatpush2.bf16.msra.mxu0 0
      %641 = vmatprep.mubr.bf16.mxu0 0
      %642 = vmatmul.mubr.bf16.gmra.mxu0 %v601
      %v643 = vpop.f32.mrf.mxu0
      %v644 = vadd.f32 0.0, %v643
      %v645 = vpop.f32.mrf.mxu0
      %v646 = vadd.f32 0.0, %v645
      %v647 = vpop.f32.mrf.mxu0
      %v648 = vpop.f32.mrf.mxu0
      %649 = vdwg.mxu0
      %650 = vrot.lane.b32.xlu0 %v393, 127
      %v651 = vpop.permute.xlu0 %650
      %652 = vrot.lane.b32.xlu0 %v394, 127
      %v653 = vpop.permute.xlu0 %652
      %654 = vrot.lane.b32.xlu0 %v395, 127
      %v655 = vpop.permute.xlu0 %654
      %vm656 = vcmask 1039360
      %v657 = vsel %vm656, %v651, %v653
      %v658 = vsel %vm656, %v653, %v655
      %v660 = vsel %vm405, %v371, 0
      %v663 = vsel %vm409, %v657, 0
      %v666 = vsel %vm409, %v658, 0
      %668 = vmatprep.subr.bf16.mxu0 0
      %669 = vmatpush1.bf16.msra.mxu0 0
      %670 = vmatprep.subr.bf16.mxu0 0
      %671 = vmatpush1.bf16.msra.mxu0 0
      %672 = vmatprep.subr.bf16.mxu0 0
      %673 = vmatpush1.bf16.msra.mxu0 0
      %674 = vmatprep.subr.bf16.mxu0 0
      %675 = vmatpush1.bf16.msra.mxu0 0
      %676 = vmatprep.subr.bf16.mxu0 0
      %677 = vmatpush1.bf16.msra.mxu0 0
      %678 = vmatprep.subr.bf16.mxu0 0
      %679 = vmatpush1.bf16.msra.mxu0 0
      %680 = vmatprep.subr.bf16.mxu0 0
      %681 = vmatpush1.bf16.msra.mxu0 0
      %682 = vmatprep.subr.bf16.mxu0 %v666
      %683 = vmatpush1.bf16.msra.mxu0 %v663
      %684 = vmatprep.subr.bf16.mxu0 0
      %685 = vmatpush2.bf16.msra.mxu0 0
      %686 = vmatprep.subr.bf16.mxu0 0
      %687 = vmatpush2.bf16.msra.mxu0 0
      %688 = vmatprep.subr.bf16.mxu0 0
      %689 = vmatpush2.bf16.msra.mxu0 0
      %690 = vmatprep.subr.bf16.mxu0 0
      %691 = vmatpush2.bf16.msra.mxu0 0
      %692 = vmatprep.subr.bf16.mxu0 0
      %693 = vmatpush2.bf16.msra.mxu0 0
      %694 = vmatprep.subr.bf16.mxu0 0
      %695 = vmatpush2.bf16.msra.mxu0 0
      %696 = vmatprep.subr.bf16.mxu0 0
      %697 = vmatpush2.bf16.msra.mxu0 0
      %698 = vmatprep.subr.bf16.mxu0 0
      %699 = vmatpush2.bf16.msra.mxu0 0
      %700 = vmatprep.mubr.bf16.mxu0 0
      %701 = vmatmul.mubr.bf16.gmra.mxu0 %v660
      %v702 = vpop.f32.mrf.mxu0
      %v703 = vadd.f32 %v644, %v702
      %v704 = vpop.f32.mrf.mxu0
      %v705 = vadd.f32 %v646, %v704
      %v706 = vpop.f32.mrf.mxu0
      %v707 = vpop.f32.mrf.mxu0
      %708 = vdwg.mxu0
      %709 = vrot.lane.b32.xlu0 %v393, 95
      %v710 = vpop.permute.xlu0 %709
      %711 = vrot.lane.b32.xlu0 %v394, 95
      %v712 = vpop.permute.xlu0 %711
      %713 = vrot.lane.b32.xlu0 %v395, 95
      %v714 = vpop.permute.xlu0 %713
      %vm715 = vcmask 777216
      %v716 = vsel %vm715, %v710, %v712
      %v717 = vsel %vm715, %v712, %v714
      %v719 = vsel %vm405, %v377, 0
      %v722 = vsel %vm409, %v716, 0
      %v725 = vsel %vm409, %v717, 0
      %727 = vmatprep.subr.bf16.mxu0 0
      %728 = vmatpush1.bf16.msra.mxu0 0
      %729 = vmatprep.subr.bf16.mxu0 0
      %730 = vmatpush1.bf16.msra.mxu0 0
      %731 = vmatprep.subr.bf16.mxu0 0
      %732 = vmatpush1.bf16.msra.mxu0 0
      %733 = vmatprep.subr.bf16.mxu0 0
      %734 = vmatpush1.bf16.msra.mxu0 0
      %735 = vmatprep.subr.bf16.mxu0 0
      %736 = vmatpush1.bf16.msra.mxu0 0
      %737 = vmatprep.subr.bf16.mxu0 0
      %738 = vmatpush1.bf16.msra.mxu0 0
      %739 = vmatprep.subr.bf16.mxu0 0
      %740 = vmatpush1.bf16.msra.mxu0 0
      %741 = vmatprep.subr.bf16.mxu0 %v725
      %742 = vmatpush1.bf16.msra.mxu0 %v722
      %743 = vmatprep.subr.bf16.mxu0 0
      %744 = vmatpush2.bf16.msra.mxu0 0
      %745 = vmatprep.subr.bf16.mxu0 0
      %746 = vmatpush2.bf16.msra.mxu0 0
      %747 = vmatprep.subr.bf16.mxu0 0
      %748 = vmatpush2.bf16.msra.mxu0 0
      %749 = vmatprep.subr.bf16.mxu0 0
      %750 = vmatpush2.bf16.msra.mxu0 0
      %751 = vmatprep.subr.bf16.mxu0 0
      %752 = vmatpush2.bf16.msra.mxu0 0
      %753 = vmatprep.subr.bf16.mxu0 0
      %754 = vmatpush2.bf16.msra.mxu0 0
      %755 = vmatprep.subr.bf16.mxu0 0
      %756 = vmatpush2.bf16.msra.mxu0 0
      %757 = vmatprep.subr.bf16.mxu0 0
      %758 = vmatpush2.bf16.msra.mxu0 0
      %759 = vmatprep.mubr.bf16.mxu0 0
      %760 = vmatmul.mubr.bf16.gmra.mxu0 %v719
      %v761 = vpop.f32.mrf.mxu0
      %v762 = vadd.f32 0.0, %v761
      %v763 = vpop.f32.mrf.mxu0
      %v764 = vadd.f32 0.0, %v763
      %v765 = vpop.f32.mrf.mxu0
      %v766 = vpop.f32.mrf.mxu0
      %767 = vdwg.mxu0
      %v768 = vadd.f32 %v703, %v762
      %v769 = vadd.f32 %v705, %v764
      %v770 = vlaneseq
      %v771 = vshrl.u32 %v770, 7
      %v772 = vsub.s32 1, %v771
      %v773 = vrot.slane %v363, %v772
      %v774 = vlaneseq
      %v775 = vshrl.u32 %v774, 7
      %v776 = vsub.s32 5, %v775
      %v777 = vrot.slane %v363, %v776
      %v780 = vlaneseq
      %v781 = vshrl.u32 %v780, 7
      %v782 = vsub.s32 1, %v781
      %v783 = vrot.slane %v773, %v782
      %v784 = vlaneseq
      %v785 = vshrl.u32 %v784, 7
      %v786 = vsub.s32 1, %v785
      %v787 = vrot.slane %v777, %v786
      %v788 = vmul.f32 %v768, %v783
      %v789 = vmul.f32 %v769, %v787
      %v790 = vadd.f32 %v589, %v788
      %v791 = vadd.f32 %v590, %v789
      %792 = vrot.lane.b32.xlu0 %v393, 110
      %v793 = vpop.permute.xlu0 %792
      %794 = vrot.lane.b32.xlu0 %v394, 110
      %v795 = vpop.permute.xlu0 %794
      %796 = vrot.lane.b32.xlu0 %v395, 110
      %v797 = vpop.permute.xlu0 %796
      %vm798 = vcmask 900096
      %v799 = vsel %vm798, %v793, %v795
      %v800 = vsel %vm798, %v795, %v797
      %v802 = vsel %vm405, %v375, 0
      %v805 = vsel %vm409, %v799, 0
      %v808 = vsel %vm409, %v800, 0
      %810 = vmatprep.subr.bf16.mxu0 0
      %811 = vmatpush1.bf16.msra.mxu0 0
      %812 = vmatprep.subr.bf16.mxu0 0
      %813 = vmatpush1.bf16.msra.mxu0 0
      %814 = vmatprep.subr.bf16.mxu0 0
      %815 = vmatpush1.bf16.msra.mxu0 0
      %816 = vmatprep.subr.bf16.mxu0 0
      %817 = vmatpush1.bf16.msra.mxu0 0
      %818 = vmatprep.subr.bf16.mxu0 0
      %819 = vmatpush1.bf16.msra.mxu0 0
      %820 = vmatprep.subr.bf16.mxu0 0
      %821 = vmatpush1.bf16.msra.mxu0 0
      %822 = vmatprep.subr.bf16.mxu0 0
      %823 = vmatpush1.bf16.msra.mxu0 0
      %824 = vmatprep.subr.bf16.mxu0 %v808
      %825 = vmatpush1.bf16.msra.mxu0 %v805
      %826 = vmatprep.subr.bf16.mxu0 0
      %827 = vmatpush2.bf16.msra.mxu0 0
      %828 = vmatprep.subr.bf16.mxu0 0
      %829 = vmatpush2.bf16.msra.mxu0 0
      %830 = vmatprep.subr.bf16.mxu0 0
      %831 = vmatpush2.bf16.msra.mxu0 0
      %832 = vmatprep.subr.bf16.mxu0 0
      %833 = vmatpush2.bf16.msra.mxu0 0
      %834 = vmatprep.subr.bf16.mxu0 0
      %835 = vmatpush2.bf16.msra.mxu0 0
      %836 = vmatprep.subr.bf16.mxu0 0
      %837 = vmatpush2.bf16.msra.mxu0 0
      %838 = vmatprep.subr.bf16.mxu0 0
      %839 = vmatpush2.bf16.msra.mxu0 0
      %840 = vmatprep.subr.bf16.mxu0 0
      %841 = vmatpush2.bf16.msra.mxu0 0
      %842 = vmatprep.mubr.bf16.mxu0 0
      %843 = vmatmul.mubr.bf16.gmra.mxu0 %v802
      %v844 = vpop.f32.mrf.mxu0
      %v845 = vadd.f32 0.0, %v844
      %v846 = vpop.f32.mrf.mxu0
      %v847 = vadd.f32 0.0, %v846
      %v848 = vpop.f32.mrf.mxu0
      %v849 = vpop.f32.mrf.mxu0
      %850 = vdwg.mxu0
      %851 = vrot.lane.b32.xlu0 %v393, 126
      %v852 = vpop.permute.xlu0 %851
      %853 = vrot.lane.b32.xlu0 %v394, 126
      %v854 = vpop.permute.xlu0 %853
      %855 = vrot.lane.b32.xlu0 %v395, 126
      %v856 = vpop.permute.xlu0 %855
      %vm857 = vcmask 1031168
      %v858 = vsel %vm857, %v852, %v854
      %v859 = vsel %vm857, %v854, %v856
      %v861 = vsel %vm405, %v372, 0
      %v864 = vsel %vm409, %v858, 0
      %v867 = vsel %vm409, %v859, 0
      %869 = vmatprep.subr.bf16.mxu0 0
      %870 = vmatpush1.bf16.msra.mxu0 0
      %871 = vmatprep.subr.bf16.mxu0 0
      %872 = vmatpush1.bf16.msra.mxu0 0
      %873 = vmatprep.subr.bf16.mxu0 0
      %874 = vmatpush1.bf16.msra.mxu0 0
      %875 = vmatprep.subr.bf16.mxu0 0
      %876 = vmatpush1.bf16.msra.mxu0 0
      %877 = vmatprep.subr.bf16.mxu0 0
      %878 = vmatpush1.bf16.msra.mxu0 0
      %879 = vmatprep.subr.bf16.mxu0 0
      %880 = vmatpush1.bf16.msra.mxu0 0
      %881 = vmatprep.subr.bf16.mxu0 0
      %882 = vmatpush1.bf16.msra.mxu0 0
      %883 = vmatprep.subr.bf16.mxu0 %v867
      %884 = vmatpush1.bf16.msra.mxu0 %v864
      %885 = vmatprep.subr.bf16.mxu0 0
      %886 = vmatpush2.bf16.msra.mxu0 0
      %887 = vmatprep.subr.bf16.mxu0 0
      %888 = vmatpush2.bf16.msra.mxu0 0
      %889 = vmatprep.subr.bf16.mxu0 0
      %890 = vmatpush2.bf16.msra.mxu0 0
      %891 = vmatprep.subr.bf16.mxu0 0
      %892 = vmatpush2.bf16.msra.mxu0 0
      %893 = vmatprep.subr.bf16.mxu0 0
      %894 = vmatpush2.bf16.msra.mxu0 0
      %895 = vmatprep.subr.bf16.mxu0 0
      %896 = vmatpush2.bf16.msra.mxu0 0
      %897 = vmatprep.subr.bf16.mxu0 0
      %898 = vmatpush2.bf16.msra.mxu0 0
      %899 = vmatprep.subr.bf16.mxu0 0
      %900 = vmatpush2.bf16.msra.mxu0 0
      %901 = vmatprep.mubr.bf16.mxu0 0
      %902 = vmatmul.mubr.bf16.gmra.mxu0 %v861
      %v903 = vpop.f32.mrf.mxu0
      %v904 = vadd.f32 %v845, %v903
      %v905 = vpop.f32.mrf.mxu0
      %v906 = vadd.f32 %v847, %v905
      %v907 = vpop.f32.mrf.mxu0
      %v908 = vpop.f32.mrf.mxu0
      %909 = vdwg.mxu0
      %910 = vrot.lane.b32.xlu0 %v393, 94
      %v911 = vpop.permute.xlu0 %910
      %912 = vrot.lane.b32.xlu0 %v394, 94
      %v913 = vpop.permute.xlu0 %912
      %914 = vrot.lane.b32.xlu0 %v395, 94
      %v915 = vpop.permute.xlu0 %914
      %vm916 = vcmask 769024
      %v917 = vsel %vm916, %v911, %v913
      %v918 = vsel %vm916, %v913, %v915
      %v920 = vsel %vm405, %v378, 0
      %v923 = vsel %vm409, %v917, 0
      %v926 = vsel %vm409, %v918, 0
      %928 = vmatprep.subr.bf16.mxu0 0
      %929 = vmatpush1.bf16.msra.mxu0 0
      %930 = vmatprep.subr.bf16.mxu0 0
      %931 = vmatpush1.bf16.msra.mxu0 0
      %932 = vmatprep.subr.bf16.mxu0 0
      %933 = vmatpush1.bf16.msra.mxu0 0
      %934 = vmatprep.subr.bf16.mxu0 0
      %935 = vmatpush1.bf16.msra.mxu0 0
      %936 = vmatprep.subr.bf16.mxu0 0
      %937 = vmatpush1.bf16.msra.mxu0 0
      %938 = vmatprep.subr.bf16.mxu0 0
      %939 = vmatpush1.bf16.msra.mxu0 0
      %940 = vmatprep.subr.bf16.mxu0 0
      %941 = vmatpush1.bf16.msra.mxu0 0
      %942 = vmatprep.subr.bf16.mxu0 %v926
      %943 = vmatpush1.bf16.msra.mxu0 %v923
      %944 = vmatprep.subr.bf16.mxu0 0
      %945 = vmatpush2.bf16.msra.mxu0 0
      %946 = vmatprep.subr.bf16.mxu0 0
      %947 = vmatpush2.bf16.msra.mxu0 0
      %948 = vmatprep.subr.bf16.mxu0 0
      %949 = vmatpush2.bf16.msra.mxu0 0
      %950 = vmatprep.subr.bf16.mxu0 0
      %951 = vmatpush2.bf16.msra.mxu0 0
      %952 = vmatprep.subr.bf16.mxu0 0
      %953 = vmatpush2.bf16.msra.mxu0 0
      %954 = vmatprep.subr.bf16.mxu0 0
      %955 = vmatpush2.bf16.msra.mxu0 0
      %956 = vmatprep.subr.bf16.mxu0 0
      %957 = vmatpush2.bf16.msra.mxu0 0
      %958 = vmatprep.subr.bf16.mxu0 0
      %959 = vmatpush2.bf16.msra.mxu0 0
      %960 = vmatprep.mubr.bf16.mxu0 0
      %961 = vmatmul.mubr.bf16.gmra.mxu0 %v920
      %v962 = vpop.f32.mrf.mxu0
      %v963 = vadd.f32 0.0, %v962
      %v964 = vpop.f32.mrf.mxu0
      %v965 = vadd.f32 0.0, %v964
      %v966 = vpop.f32.mrf.mxu0
      %v967 = vpop.f32.mrf.mxu0
      %968 = vdwg.mxu0
      %v969 = vadd.f32 %v904, %v963
      %v970 = vadd.f32 %v906, %v965
      %v971 = vlaneseq
      %v972 = vshrl.u32 %v971, 7
      %v973 = vsub.s32 2, %v972
      %v974 = vrot.slane %v363, %v973
      %v975 = vlaneseq
      %v976 = vshrl.u32 %v975, 7
      %v977 = vsub.s32 6, %v976
      %v978 = vrot.slane %v363, %v977
      %v981 = vlaneseq
      %v982 = vshrl.u32 %v981, 7
      %v983 = vsub.s32 2, %v982
      %v984 = vrot.slane %v974, %v983
      %v985 = vlaneseq
      %v986 = vshrl.u32 %v985, 7
      %v987 = vsub.s32 2, %v986
      %v988 = vrot.slane %v978, %v987
      %v989 = vmul.f32 %v969, %v984
      %v990 = vmul.f32 %v970, %v988
      %v991 = vadd.f32 %v790, %v989
      %v992 = vadd.f32 %v791, %v990
      %994 = vset.pattern.permute.xlu0 0
      %995 = vperm.xlu0 %994, %v364
      %v996 = vpop.permute.xlu0 %995
      %v998 = vmul.f32 %v991, %v996
      %v999 = vmul.f32 %v992, %v996
      %1001 = vset.pattern.permute.xlu0 0
      %1002 = vperm.xlu0 %1001, %v365
      %v1003 = vpop.permute.xlu0 %1002
      %v1005 = vadd.f32 %v998, %v1003
      %v1006 = vadd.f32 %v999, %v1003
      %v1007 = vxor.u32 %v1005, 2147483648
      %v1008 = vxor.u32 %v1006, 2147483648
      %v1009 = vmul.f32 %v1007, 1.442695
      %v1010 = vpow.pop %v1009
      %v1011 = vmul.f32 %v1008, 1.442695
      %v1012 = vpow.pop %v1011
      %v1013 = vadd.f32 %v1010, 1.0
      %v1014 = vadd.f32 %v1012, 1.0
      %v1015 = vrcp.pop %v1013
      %v1016 = vmul.f32 1.0, %v1015
      %v1017 = vrcp.pop %v1014
      %v1018 = vmul.f32 1.0, %v1017
      %v1019 = vmul.f32 %v1005, %v1016
      %v1020 = vmul.f32 %v1006, %v1018
      %1021 = vst [vmem:[#allocation2] sm:$0xff] 0
      %vm1022 = vcmask 273408
      %1023 = vst.msk [vmem:[#allocation2 + $0x8] sm:$0xf] %vm1022, 0
      %v1024 = vpack.c.bf16 %v1019, %v1019
      %v1025 = vpack.c.bf16 %v1020, %v1020
      %v1028 = vunpack.c.l.b16 %v1024
      %v1029 = vunpack.c.l.b16 %v1025
      %v1030 = vpack.c.b16 %v1029, %v1028
      %1031 = vrot.lane.b32.xlu0 %v1030, 17
      %v1032 = vpop.permute.xlu0 %1031
      %v1033 = vrot.slane %v1032, 4
      %vm1034 = vcmask 138240
      %v1035 = vsel %vm1034, %v1033, %v1032
      %vm1038 = vcmask 1043592
      %vm1039 = vcmask 1047556
      %vm1040 = vmor %vm1039, %vm1038
      %1041 = vst.msk [vmem:[#allocation2] sm:$0xff] %vm1040, %v1035
      %vm1042 = vcmask 134144
      %1043 = vst.msk [vmem:[#allocation2 + $0x8] sm:$0xf] %vm1042, %v1033
      %v1044 = vld [vmem:[#allocation2] sm:$0xff]
      %v1045 = vld [vmem:[#allocation2 + $0x8] sm:$0xf]
      %v1048 = vunpack.c.l.b16 %v1044
      %v1049 = vunpack.c.h.b16 %v1044
      %v1050 = vunpack.c.l.b16 %v1045
      %v1051 = vpack.c.b16 %v1048, %v1048
      %v1052 = vpack.c.b16 %v1049, %v1049
      %v1053 = vpack.c.b16 %v1050, %v1050
      %1054 = vrot.lane.b32.xlu0 %v1051, 112
      %v1055 = vpop.permute.xlu0 %1054
      %1056 = vrot.lane.b32.xlu0 %v1052, 112
      %v1057 = vpop.permute.xlu0 %1056
      %1058 = vrot.lane.b32.xlu0 %v1053, 112
      %v1059 = vpop.permute.xlu0 %1058
      %v1060 = vsel %vm402, %v1055, %v1057
      %v1061 = vsel %vm402, %v1057, %v1059
      %v1063 = vsel %vm405, %v382, 0
      %v1066 = vsel %vm409, %v1060, 0
      %v1069 = vsel %vm409, %v1061, 0
      %1071 = vmatprep.subr.bf16.mxu0 0
      %1072 = vmatpush1.bf16.msra.mxu0 0
      %1073 = vmatprep.subr.bf16.mxu0 0
      %1074 = vmatpush1.bf16.msra.mxu0 0
      %1075 = vmatprep.subr.bf16.mxu0 0
      %1076 = vmatpush1.bf16.msra.mxu0 0
      %1077 = vmatprep.subr.bf16.mxu0 0
      %1078 = vmatpush1.bf16.msra.mxu0 0
      %1079 = vmatprep.subr.bf16.mxu0 0
      %1080 = vmatpush1.bf16.msra.mxu0 0
      %1081 = vmatprep.subr.bf16.mxu0 0
      %1082 = vmatpush1.bf16.msra.mxu0 0
      %1083 = vmatprep.subr.bf16.mxu0 0
      %1084 = vmatpush1.bf16.msra.mxu0 0
      %1085 = vmatprep.subr.bf16.mxu0 %v1069
      %1086 = vmatpush1.bf16.msra.mxu0 %v1066
      %1087 = vmatprep.subr.bf16.mxu0 0
      %1088 = vmatpush2.bf16.msra.mxu0 0
      %1089 = vmatprep.subr.bf16.mxu0 0
      %1090 = vmatpush2.bf16.msra.mxu0 0
      %1091 = vmatprep.subr.bf16.mxu0 0
      %1092 = vmatpush2.bf16.msra.mxu0 0
      %1093 = vmatprep.subr.bf16.mxu0 0
      %1094 = vmatpush2.bf16.msra.mxu0 0
      %1095 = vmatprep.subr.bf16.mxu0 0
      %1096 = vmatpush2.bf16.msra.mxu0 0
      %1097 = vmatprep.subr.bf16.mxu0 0
      %1098 = vmatpush2.bf16.msra.mxu0 0
      %1099 = vmatprep.subr.bf16.mxu0 0
      %1100 = vmatpush2.bf16.msra.mxu0 0
      %1101 = vmatprep.subr.bf16.mxu0 0
      %1102 = vmatpush2.bf16.msra.mxu0 0
      %1103 = vmatprep.mubr.bf16.mxu0 0
      %1104 = vmatmul.mubr.bf16.gmra.mxu0 %v1063
      %v1105 = vpop.f32.mrf.mxu0
      %v1106 = vadd.f32 0.0, %v1105
      %v1107 = vpop.f32.mrf.mxu0
      %v1108 = vadd.f32 0.0, %v1107
      %v1109 = vpop.f32.mrf.mxu0
      %v1110 = vpop.f32.mrf.mxu0
      %1111 = vdwg.mxu0
      %v1113 = vsel %vm405, %v379, 0
      %v1116 = vsel %vm409, %v1051, 0
      %v1119 = vsel %vm409, %v1052, 0
      %1121 = vmatprep.subr.bf16.mxu0 0
      %1122 = vmatpush1.bf16.msra.mxu0 0
      %1123 = vmatprep.subr.bf16.mxu0 0
      %1124 = vmatpush1.bf16.msra.mxu0 0
      %1125 = vmatprep.subr.bf16.mxu0 0
      %1126 = vmatpush1.bf16.msra.mxu0 0
      %1127 = vmatprep.subr.bf16.mxu0 0
      %1128 = vmatpush1.bf16.msra.mxu0 0
      %1129 = vmatprep.subr.bf16.mxu0 0
      %1130 = vmatpush1.bf16.msra.mxu0 0
      %1131 = vmatprep.subr.bf16.mxu0 0
      %1132 = vmatpush1.bf16.msra.mxu0 0
      %1133 = vmatprep.subr.bf16.mxu0 0
      %1134 = vmatpush1.bf16.msra.mxu0 0
      %1135 = vmatprep.subr.bf16.mxu0 %v1119
      %1136 = vmatpush1.bf16.msra.mxu0 %v1116
      %1137 = vmatprep.subr.bf16.mxu0 0
      %1138 = vmatpush2.bf16.msra.mxu0 0
      %1139 = vmatprep.subr.bf16.mxu0 0
      %1140 = vmatpush2.bf16.msra.mxu0 0
      %1141 = vmatprep.subr.bf16.mxu0 0
      %1142 = vmatpush2.bf16.msra.mxu0 0
      %1143 = vmatprep.subr.bf16.mxu0 0
      %1144 = vmatpush2.bf16.msra.mxu0 0
      %1145 = vmatprep.subr.bf16.mxu0 0
      %1146 = vmatpush2.bf16.msra.mxu0 0
      %1147 = vmatprep.subr.bf16.mxu0 0
      %1148 = vmatpush2.bf16.msra.mxu0 0
      %1149 = vmatprep.subr.bf16.mxu0 0
      %1150 = vmatpush2.bf16.msra.mxu0 0
      %1151 = vmatprep.subr.bf16.mxu0 0
      %1152 = vmatpush2.bf16.msra.mxu0 0
      %1153 = vmatprep.mubr.bf16.mxu0 0
      %1154 = vmatmul.mubr.bf16.gmra.mxu0 %v1113
      %v1155 = vpop.f32.mrf.mxu0
      %v1156 = vadd.f32 %v1106, %v1155
      %v1157 = vpop.f32.mrf.mxu0
      %v1158 = vadd.f32 %v1108, %v1157
      %v1159 = vpop.f32.mrf.mxu0
      %v1160 = vpop.f32.mrf.mxu0
      %1161 = vdwg.mxu0
      %1162 = vrot.lane.b32.xlu0 %v1051, 96
      %v1163 = vpop.permute.xlu0 %1162
      %1164 = vrot.lane.b32.xlu0 %v1052, 96
      %v1165 = vpop.permute.xlu0 %1164
      %1166 = vrot.lane.b32.xlu0 %v1053, 96
      %v1167 = vpop.permute.xlu0 %1166
      %v1168 = vsel %vm513, %v1163, %v1165
      %v1169 = vsel %vm513, %v1165, %v1167
      %v1171 = vsel %vm405, %v385, 0
      %v1174 = vsel %vm409, %v1168, 0
      %v1177 = vsel %vm409, %v1169, 0
      %1179 = vmatprep.subr.bf16.mxu0 0
      %1180 = vmatpush1.bf16.msra.mxu0 0
      %1181 = vmatprep.subr.bf16.mxu0 0
      %1182 = vmatpush1.bf16.msra.mxu0 0
      %1183 = vmatprep.subr.bf16.mxu0 0
      %1184 = vmatpush1.bf16.msra.mxu0 0
      %1185 = vmatprep.subr.bf16.mxu0 0
      %1186 = vmatpush1.bf16.msra.mxu0 0
      %1187 = vmatprep.subr.bf16.mxu0 0
      %1188 = vmatpush1.bf16.msra.mxu0 0
      %1189 = vmatprep.subr.bf16.mxu0 0
      %1190 = vmatpush1.bf16.msra.mxu0 0
      %1191 = vmatprep.subr.bf16.mxu0 0
      %1192 = vmatpush1.bf16.msra.mxu0 0
      %1193 = vmatprep.subr.bf16.mxu0 %v1177
      %1194 = vmatpush1.bf16.msra.mxu0 %v1174
      %1195 = vmatprep.subr.bf16.mxu0 0
      %1196 = vmatpush2.bf16.msra.mxu0 0
      %1197 = vmatprep.subr.bf16.mxu0 0
      %1198 = vmatpush2.bf16.msra.mxu0 0
      %1199 = vmatprep.subr.bf16.mxu0 0
      %1200 = vmatpush2.bf16.msra.mxu0 0
      %1201 = vmatprep.subr.bf16.mxu0 0
      %1202 = vmatpush2.bf16.msra.mxu0 0
      %1203 = vmatprep.subr.bf16.mxu0 0
      %1204 = vmatpush2.bf16.msra.mxu0 0
      %1205 = vmatprep.subr.bf16.mxu0 0
      %1206 = vmatpush2.bf16.msra.mxu0 0
      %1207 = vmatprep.subr.bf16.mxu0 0
      %1208 = vmatpush2.bf16.msra.mxu0 0
      %1209 = vmatprep.subr.bf16.mxu0 0
      %1210 = vmatpush2.bf16.msra.mxu0 0
      %1211 = vmatprep.mubr.bf16.mxu0 0
      %1212 = vmatmul.mubr.bf16.gmra.mxu0 %v1171
      %v1213 = vpop.f32.mrf.mxu0
      %v1214 = vadd.f32 0.0, %v1213
      %v1215 = vpop.f32.mrf.mxu0
      %v1216 = vadd.f32 0.0, %v1215
      %v1217 = vpop.f32.mrf.mxu0
      %v1218 = vpop.f32.mrf.mxu0
      %1219 = vdwg.mxu0
      %v1220 = vadd.f32 %v1156, %v1214
      %v1221 = vadd.f32 %v1158, %v1216
      %v1222 = vmul.f32 %v1220, %v582
      %v1223 = vmul.f32 %v1221, %v586
      %v1224 = vadd.f32 %v1222, 0.0
      %v1225 = vadd.f32 %v1223, 0.0
      %1226 = vrot.lane.b32.xlu0 %v1051, 111
      %v1227 = vpop.permute.xlu0 %1226
      %1228 = vrot.lane.b32.xlu0 %v1052, 111
      %v1229 = vpop.permute.xlu0 %1228
      %1230 = vrot.lane.b32.xlu0 %v1053, 111
      %v1231 = vpop.permute.xlu0 %1230
      %v1232 = vsel %vm597, %v1227, %v1229
      %v1233 = vsel %vm597, %v1229, %v1231
      %v1235 = vsel %vm405, %v383, 0
      %v1238 = vsel %vm409, %v1232, 0
      %v1241 = vsel %vm409, %v1233, 0
      %1243 = vmatprep.subr.bf16.mxu0 0
      %1244 = vmatpush1.bf16.msra.mxu0 0
      %1245 = vmatprep.subr.bf16.mxu0 0
      %1246 = vmatpush1.bf16.msra.mxu0 0
      %1247 = vmatprep.subr.bf16.mxu0 0
      %1248 = vmatpush1.bf16.msra.mxu0 0
      %1249 = vmatprep.subr.bf16.mxu0 0
      %1250 = vmatpush1.bf16.msra.mxu0 0
      %1251 = vmatprep.subr.bf16.mxu0 0
      %1252 = vmatpush1.bf16.msra.mxu0 0
      %1253 = vmatprep.subr.bf16.mxu0 0
      %1254 = vmatpush1.bf16.msra.mxu0 0
      %1255 = vmatprep.subr.bf16.mxu0 0
      %1256 = vmatpush1.bf16.msra.mxu0 0
      %1257 = vmatprep.subr.bf16.mxu0 %v1241
      %1258 = vmatpush1.bf16.msra.mxu0 %v1238
      %1259 = vmatprep.subr.bf16.mxu0 0
      %1260 = vmatpush2.bf16.msra.mxu0 0
      %1261 = vmatprep.subr.bf16.mxu0 0
      %1262 = vmatpush2.bf16.msra.mxu0 0
      %1263 = vmatprep.subr.bf16.mxu0 0
      %1264 = vmatpush2.bf16.msra.mxu0 0
      %1265 = vmatprep.subr.bf16.mxu0 0
      %1266 = vmatpush2.bf16.msra.mxu0 0
      %1267 = vmatprep.subr.bf16.mxu0 0
      %1268 = vmatpush2.bf16.msra.mxu0 0
      %1269 = vmatprep.subr.bf16.mxu0 0
      %1270 = vmatpush2.bf16.msra.mxu0 0
      %1271 = vmatprep.subr.bf16.mxu0 0
      %1272 = vmatpush2.bf16.msra.mxu0 0
      %1273 = vmatprep.subr.bf16.mxu0 0
      %1274 = vmatpush2.bf16.msra.mxu0 0
      %1275 = vmatprep.mubr.bf16.mxu0 0
      %1276 = vmatmul.mubr.bf16.gmra.mxu0 %v1235
      %v1277 = vpop.f32.mrf.mxu0
      %v1278 = vadd.f32 0.0, %v1277
      %v1279 = vpop.f32.mrf.mxu0
      %v1280 = vadd.f32 0.0, %v1279
      %v1281 = vpop.f32.mrf.mxu0
      %v1282 = vpop.f32.mrf.mxu0
      %1283 = vdwg.mxu0
      %1284 = vrot.lane.b32.xlu0 %v1051, 127
      %v1285 = vpop.permute.xlu0 %1284
      %1286 = vrot.lane.b32.xlu0 %v1052, 127
      %v1287 = vpop.permute.xlu0 %1286
      %1288 = vrot.lane.b32.xlu0 %v1053, 127
      %v1289 = vpop.permute.xlu0 %1288
      %v1290 = vsel %vm656, %v1285, %v1287
      %v1291 = vsel %vm656, %v1287, %v1289
      %v1293 = vsel %vm405, %v380, 0
      %v1296 = vsel %vm409, %v1290, 0
      %v1299 = vsel %vm409, %v1291, 0
      %1301 = vmatprep.subr.bf16.mxu0 0
      %1302 = vmatpush1.bf16.msra.mxu0 0
      %1303 = vmatprep.subr.bf16.mxu0 0
      %1304 = vmatpush1.bf16.msra.mxu0 0
      %1305 = vmatprep.subr.bf16.mxu0 0
      %1306 = vmatpush1.bf16.msra.mxu0 0
      %1307 = vmatprep.subr.bf16.mxu0 0
      %1308 = vmatpush1.bf16.msra.mxu0 0
      %1309 = vmatprep.subr.bf16.mxu0 0
      %1310 = vmatpush1.bf16.msra.mxu0 0
      %1311 = vmatprep.subr.bf16.mxu0 0
      %1312 = vmatpush1.bf16.msra.mxu0 0
      %1313 = vmatprep.subr.bf16.mxu0 0
      %1314 = vmatpush1.bf16.msra.mxu0 0
      %1315 = vmatprep.subr.bf16.mxu0 %v1299
      %1316 = vmatpush1.bf16.msra.mxu0 %v1296
      %1317 = vmatprep.subr.bf16.mxu0 0
      %1318 = vmatpush2.bf16.msra.mxu0 0
      %1319 = vmatprep.subr.bf16.mxu0 0
      %1320 = vmatpush2.bf16.msra.mxu0 0
      %1321 = vmatprep.subr.bf16.mxu0 0
      %1322 = vmatpush2.bf16.msra.mxu0 0
      %1323 = vmatprep.subr.bf16.mxu0 0
      %1324 = vmatpush2.bf16.msra.mxu0 0
      %1325 = vmatprep.subr.bf16.mxu0 0
      %1326 = vmatpush2.bf16.msra.mxu0 0
      %1327 = vmatprep.subr.bf16.mxu0 0
      %1328 = vmatpush2.bf16.msra.mxu0 0
      %1329 = vmatprep.subr.bf16.mxu0 0
      %1330 = vmatpush2.bf16.msra.mxu0 0
      %1331 = vmatprep.subr.bf16.mxu0 0
      %1332 = vmatpush2.bf16.msra.mxu0 0
      %1333 = vmatprep.mubr.bf16.mxu0 0
      %1334 = vmatmul.mubr.bf16.gmra.mxu0 %v1293
      %v1335 = vpop.f32.mrf.mxu0
      %v1336 = vadd.f32 %v1278, %v1335
      %v1337 = vpop.f32.mrf.mxu0
      %v1338 = vadd.f32 %v1280, %v1337
      %v1339 = vpop.f32.mrf.mxu0
      %v1340 = vpop.f32.mrf.mxu0
      %1341 = vdwg.mxu0
      %1342 = vrot.lane.b32.xlu0 %v1051, 95
      %v1343 = vpop.permute.xlu0 %1342
      %1344 = vrot.lane.b32.xlu0 %v1052, 95
      %v1345 = vpop.permute.xlu0 %1344
      %1346 = vrot.lane.b32.xlu0 %v1053, 95
      %v1347 = vpop.permute.xlu0 %1346
      %v1348 = vsel %vm715, %v1343, %v1345
      %v1349 = vsel %vm715, %v1345, %v1347
      %v1351 = vsel %vm405, %v386, 0
      %v1354 = vsel %vm409, %v1348, 0
      %v1357 = vsel %vm409, %v1349, 0
      %1359 = vmatprep.subr.bf16.mxu0 0
      %1360 = vmatpush1.bf16.msra.mxu0 0
      %1361 = vmatprep.subr.bf16.mxu0 0
      %1362 = vmatpush1.bf16.msra.mxu0 0
      %1363 = vmatprep.subr.bf16.mxu0 0
      %1364 = vmatpush1.bf16.msra.mxu0 0
      %1365 = vmatprep.subr.bf16.mxu0 0
      %1366 = vmatpush1.bf16.msra.mxu0 0
      %1367 = vmatprep.subr.bf16.mxu0 0
      %1368 = vmatpush1.bf16.msra.mxu0 0
      %1369 = vmatprep.subr.bf16.mxu0 0
      %1370 = vmatpush1.bf16.msra.mxu0 0
      %1371 = vmatprep.subr.bf16.mxu0 0
      %1372 = vmatpush1.bf16.msra.mxu0 0
      %1373 = vmatprep.subr.bf16.mxu0 %v1357
      %1374 = vmatpush1.bf16.msra.mxu0 %v1354
      %1375 = vmatprep.subr.bf16.mxu0 0
      %1376 = vmatpush2.bf16.msra.mxu0 0
      %1377 = vmatprep.subr.bf16.mxu0 0
      %1378 = vmatpush2.bf16.msra.mxu0 0
      %1379 = vmatprep.subr.bf16.mxu0 0
      %1380 = vmatpush2.bf16.msra.mxu0 0
      %1381 = vmatprep.subr.bf16.mxu0 0
      %1382 = vmatpush2.bf16.msra.mxu0 0
      %1383 = vmatprep.subr.bf16.mxu0 0
      %1384 = vmatpush2.bf16.msra.mxu0 0
      %1385 = vmatprep.subr.bf16.mxu0 0
      %1386 = vmatpush2.bf16.msra.mxu0 0
      %1387 = vmatprep.subr.bf16.mxu0 0
      %1388 = vmatpush2.bf16.msra.mxu0 0
      %1389 = vmatprep.subr.bf16.mxu0 0
      %1390 = vmatpush2.bf16.msra.mxu0 0
      %1391 = vmatprep.mubr.bf16.mxu0 0
      %1392 = vmatmul.mubr.bf16.gmra.mxu0 %v1351
      %v1393 = vpop.f32.mrf.mxu0
      %v1394 = vadd.f32 0.0, %v1393
      %v1395 = vpop.f32.mrf.mxu0
      %v1396 = vadd.f32 0.0, %v1395
      %v1397 = vpop.f32.mrf.mxu0
      %v1398 = vpop.f32.mrf.mxu0
      %1399 = vdwg.mxu0
      %v1400 = vadd.f32 %v1336, %v1394
      %v1401 = vadd.f32 %v1338, %v1396
      %v1402 = vmul.f32 %v1400, %v783
      %v1403 = vmul.f32 %v1401, %v787
      %v1404 = vadd.f32 %v1224, %v1402
      %v1405 = vadd.f32 %v1225, %v1403
      %1406 = vrot.lane.b32.xlu0 %v1051, 110
      %v1407 = vpop.permute.xlu0 %1406
      %1408 = vrot.lane.b32.xlu0 %v1052, 110
      %v1409 = vpop.permute.xlu0 %1408
      %1410 = vrot.lane.b32.xlu0 %v1053, 110
      %v1411 = vpop.permute.xlu0 %1410
      %v1412 = vsel %vm798, %v1407, %v1409
      %v1413 = vsel %vm798, %v1409, %v1411
      %v1415 = vsel %vm405, %v384, 0
      %v1418 = vsel %vm409, %v1412, 0
      %v1421 = vsel %vm409, %v1413, 0
      %1423 = vmatprep.subr.bf16.mxu0 0
      %1424 = vmatpush1.bf16.msra.mxu0 0
      %1425 = vmatprep.subr.bf16.mxu0 0
      %1426 = vmatpush1.bf16.msra.mxu0 0
      %1427 = vmatprep.subr.bf16.mxu0 0
      %1428 = vmatpush1.bf16.msra.mxu0 0
      %1429 = vmatprep.subr.bf16.mxu0 0
      %1430 = vmatpush1.bf16.msra.mxu0 0
      %1431 = vmatprep.subr.bf16.mxu0 0
      %1432 = vmatpush1.bf16.msra.mxu0 0
      %1433 = vmatprep.subr.bf16.mxu0 0
      %1434 = vmatpush1.bf16.msra.mxu0 0
      %1435 = vmatprep.subr.bf16.mxu0 0
      %1436 = vmatpush1.bf16.msra.mxu0 0
      %1437 = vmatprep.subr.bf16.mxu0 %v1421
      %1438 = vmatpush1.bf16.msra.mxu0 %v1418
      %1439 = vmatprep.subr.bf16.mxu0 0
      %1440 = vmatpush2.bf16.msra.mxu0 0
      %1441 = vmatprep.subr.bf16.mxu0 0
      %1442 = vmatpush2.bf16.msra.mxu0 0
      %1443 = vmatprep.subr.bf16.mxu0 0
      %1444 = vmatpush2.bf16.msra.mxu0 0
      %1445 = vmatprep.subr.bf16.mxu0 0
      %1446 = vmatpush2.bf16.msra.mxu0 0
      %1447 = vmatprep.subr.bf16.mxu0 0
      %1448 = vmatpush2.bf16.msra.mxu0 0
      %1449 = vmatprep.subr.bf16.mxu0 0
      %1450 = vmatpush2.bf16.msra.mxu0 0
      %1451 = vmatprep.subr.bf16.mxu0 0
      %1452 = vmatpush2.bf16.msra.mxu0 0
      %1453 = vmatprep.subr.bf16.mxu0 0
      %1454 = vmatpush2.bf16.msra.mxu0 0
      %1455 = vmatprep.mubr.bf16.mxu0 0
      %1456 = vmatmul.mubr.bf16.gmra.mxu0 %v1415
      %v1457 = vpop.f32.mrf.mxu0
      %v1458 = vadd.f32 0.0, %v1457
      %v1459 = vpop.f32.mrf.mxu0
      %v1460 = vadd.f32 0.0, %v1459
      %v1461 = vpop.f32.mrf.mxu0
      %v1462 = vpop.f32.mrf.mxu0
      %1463 = vdwg.mxu0
      %1464 = vrot.lane.b32.xlu0 %v1051, 126
      %v1465 = vpop.permute.xlu0 %1464
      %1466 = vrot.lane.b32.xlu0 %v1052, 126
      %v1467 = vpop.permute.xlu0 %1466
      %1468 = vrot.lane.b32.xlu0 %v1053, 126
      %v1469 = vpop.permute.xlu0 %1468
      %v1470 = vsel %vm857, %v1465, %v1467
      %v1471 = vsel %vm857, %v1467, %v1469
      %v1473 = vsel %vm405, %v381, 0
      %v1476 = vsel %vm409, %v1470, 0
      %v1479 = vsel %vm409, %v1471, 0
      %1481 = vmatprep.subr.bf16.mxu0 0
      %1482 = vmatpush1.bf16.msra.mxu0 0
      %1483 = vmatprep.subr.bf16.mxu0 0
      %1484 = vmatpush1.bf16.msra.mxu0 0
      %1485 = vmatprep.subr.bf16.mxu0 0
      %1486 = vmatpush1.bf16.msra.mxu0 0
      %1487 = vmatprep.subr.bf16.mxu0 0
      %1488 = vmatpush1.bf16.msra.mxu0 0
      %1489 = vmatprep.subr.bf16.mxu0 0
      %1490 = vmatpush1.bf16.msra.mxu0 0
      %1491 = vmatprep.subr.bf16.mxu0 0
      %1492 = vmatpush1.bf16.msra.mxu0 0
      %1493 = vmatprep.subr.bf16.mxu0 0
      %1494 = vmatpush1.bf16.msra.mxu0 0
      %1495 = vmatprep.subr.bf16.mxu0 %v1479
      %1496 = vmatpush1.bf16.msra.mxu0 %v1476
      %1497 = vmatprep.subr.bf16.mxu0 0
      %1498 = vmatpush2.bf16.msra.mxu0 0
      %1499 = vmatprep.subr.bf16.mxu0 0
      %1500 = vmatpush2.bf16.msra.mxu0 0
      %1501 = vmatprep.subr.bf16.mxu0 0
      %1502 = vmatpush2.bf16.msra.mxu0 0
      %1503 = vmatprep.subr.bf16.mxu0 0
      %1504 = vmatpush2.bf16.msra.mxu0 0
      %1505 = vmatprep.subr.bf16.mxu0 0
      %1506 = vmatpush2.bf16.msra.mxu0 0
      %1507 = vmatprep.subr.bf16.mxu0 0
      %1508 = vmatpush2.bf16.msra.mxu0 0
      %1509 = vmatprep.subr.bf16.mxu0 0
      %1510 = vmatpush2.bf16.msra.mxu0 0
      %1511 = vmatprep.subr.bf16.mxu0 0
      %1512 = vmatpush2.bf16.msra.mxu0 0
      %1513 = vmatprep.mubr.bf16.mxu0 0
      %1514 = vmatmul.mubr.bf16.gmra.mxu0 %v1473
      %v1515 = vpop.f32.mrf.mxu0
      %v1516 = vadd.f32 %v1458, %v1515
      %v1517 = vpop.f32.mrf.mxu0
      %v1518 = vadd.f32 %v1460, %v1517
      %v1519 = vpop.f32.mrf.mxu0
      %v1520 = vpop.f32.mrf.mxu0
      %1521 = vdwg.mxu0
      %1522 = vrot.lane.b32.xlu0 %v1051, 94
      %v1523 = vpop.permute.xlu0 %1522
      %1524 = vrot.lane.b32.xlu0 %v1052, 94
      %v1525 = vpop.permute.xlu0 %1524
      %1526 = vrot.lane.b32.xlu0 %v1053, 94
      %v1527 = vpop.permute.xlu0 %1526
      %v1528 = vsel %vm916, %v1523, %v1525
      %v1529 = vsel %vm916, %v1525, %v1527
      %v1531 = vsel %vm405, %v387, 0
      %v1534 = vsel %vm409, %v1528, 0
      %v1537 = vsel %vm409, %v1529, 0
      %1539 = vmatprep.subr.bf16.mxu0 0
      %1540 = vmatpush1.bf16.msra.mxu0 0
      %1541 = vmatprep.subr.bf16.mxu0 0
      %1542 = vmatpush1.bf16.msra.mxu0 0
      %1543 = vmatprep.subr.bf16.mxu0 0
      %1544 = vmatpush1.bf16.msra.mxu0 0
      %1545 = vmatprep.subr.bf16.mxu0 0
      %1546 = vmatpush1.bf16.msra.mxu0 0
      %1547 = vmatprep.subr.bf16.mxu0 0
      %1548 = vmatpush1.bf16.msra.mxu0 0
      %1549 = vmatprep.subr.bf16.mxu0 0
      %1550 = vmatpush1.bf16.msra.mxu0 0
      %1551 = vmatprep.subr.bf16.mxu0 0
      %1552 = vmatpush1.bf16.msra.mxu0 0
      %1553 = vmatprep.subr.bf16.mxu0 %v1537
      %1554 = vmatpush1.bf16.msra.mxu0 %v1534
      %1555 = vmatprep.subr.bf16.mxu0 0
      %1556 = vmatpush2.bf16.msra.mxu0 0
      %1557 = vmatprep.subr.bf16.mxu0 0
      %1558 = vmatpush2.bf16.msra.mxu0 0
      %1559 = vmatprep.subr.bf16.mxu0 0
      %1560 = vmatpush2.bf16.msra.mxu0 0
      %1561 = vmatprep.subr.bf16.mxu0 0
      %1562 = vmatpush2.bf16.msra.mxu0 0
      %1563 = vmatprep.subr.bf16.mxu0 0
      %1564 = vmatpush2.bf16.msra.mxu0 0
      %1565 = vmatprep.subr.bf16.mxu0 0
      %1566 = vmatpush2.bf16.msra.mxu0 0
      %1567 = vmatprep.subr.bf16.mxu0 0
      %1568 = vmatpush2.bf16.msra.mxu0 0
      %1569 = vmatprep.subr.bf16.mxu0 0
      %1570 = vmatpush2.bf16.msra.mxu0 0
      %1571 = vmatprep.mubr.bf16.mxu0 0
      %1572 = vmatmul.mubr.bf16.gmra.mxu0 %v1531
      %v1573 = vpop.f32.mrf.mxu0
      %v1574 = vadd.f32 0.0, %v1573
      %v1575 = vpop.f32.mrf.mxu0
      %v1576 = vadd.f32 0.0, %v1575
      %v1577 = vpop.f32.mrf.mxu0
      %v1578 = vpop.f32.mrf.mxu0
      %1579 = vdwg.mxu0
      %v1580 = vadd.f32 %v1516, %v1574
      %v1581 = vadd.f32 %v1518, %v1576
      %v1582 = vmul.f32 %v1580, %v984
      %v1583 = vmul.f32 %v1581, %v988
      %v1584 = vadd.f32 %v1404, %v1582
      %v1585 = vadd.f32 %v1405, %v1583
      %1587 = vset.pattern.permute.xlu0 0
      %1588 = vperm.xlu0 %1587, %v366
      %v1589 = vpop.permute.xlu0 %1588
      %v1591 = vmul.f32 %v1584, %v1589
      %v1592 = vmul.f32 %v1585, %v1589
      %1594 = vset.pattern.permute.xlu0 0
      %1595 = vperm.xlu0 %1594, %v367
      %v1596 = vpop.permute.xlu0 %1595
      %v1598 = vadd.f32 %v1591, %v1596
      %v1599 = vadd.f32 %v1592, %v1596
      %v1600 = vxor.u32 %v1598, 2147483648
      %v1601 = vxor.u32 %v1599, 2147483648
      %v1602 = vmul.f32 %v1600, 1.442695
      %v1603 = vpow.pop %v1602
      %v1604 = vmul.f32 %v1601, 1.442695
      %v1605 = vpow.pop %v1604
      %v1606 = vadd.f32 %v1603, 1.0
      %v1607 = vadd.f32 %v1605, 1.0
      %v1608 = vrcp.pop %v1606
      %v1609 = vmul.f32 1.0, %v1608
      %v1610 = vrcp.pop %v1607
      %v1611 = vmul.f32 1.0, %v1610
      %v1612 = vmul.f32 %v1598, %v1609
      %v1613 = vmul.f32 %v1599, %v1611
      %v1614 = vunpack.c.l.bf16 %v361
      %v1615 = vunpack.c.h.bf16 %v361
      %v1616 = vunpack.c.l.bf16 %v362
      %1620 = vrot.lane.b32.xlu0 %v1614, 111
      %v1621 = vpop.permute.xlu0 %1620
      %1622 = vrot.lane.b32.xlu0 %v1615, 111
      %v1623 = vpop.permute.xlu0 %1622
      %1624 = vrot.lane.b32.xlu0 %v1616, 111
      %v1625 = vpop.permute.xlu0 %1624
      %vm1626 = vcmask 908288
      %v1627 = vsel %vm1626, %v1621, %v1623
      %v1628 = vsel %vm1626, %v1623, %v1625
      %v1631 = vadd.f32 %v1612, %v1627
      %v1632 = vadd.f32 %v1613, %v1628
      %1634 = vset.pattern.permute.xlu0 0
      %1635 = vperm.xlu0 %1634, %v368
      %v1636 = vpop.permute.xlu0 %1635
      %v1638 = vmul.f32 %v1631, %v1636
      %v1639 = vmul.f32 %v1632, %v1636
      %1641 = vset.pattern.permute.xlu0 0
      %1642 = vperm.xlu0 %1641, %v369
      %v1643 = vpop.permute.xlu0 %1642
      %v1645 = vadd.f32 %v1638, %v1643
      %v1646 = vadd.f32 %v1639, %v1643
      %v1647 = vxor.u32 %v1645, 2147483648
      %v1648 = vxor.u32 %v1646, 2147483648
      %v1649 = vmul.f32 %v1647, 1.442695
      %v1650 = vpow.pop %v1649
      %v1651 = vmul.f32 %v1648, 1.442695
      %v1652 = vpow.pop %v1651
      %v1653 = vadd.f32 %v1650, 1.0
      %v1654 = vadd.f32 %v1652, 1.0
      %v1655 = vrcp.pop %v1653
      %v1656 = vmul.f32 1.0, %v1655
      %v1657 = vrcp.pop %v1654
      %v1658 = vmul.f32 1.0, %v1657
      %v1659 = vmul.f32 %v1645, %v1656
      %v1660 = vmul.f32 %v1646, %v1658
      %1661 = vst [vmem:[%s359] sm:$0xff] %v1659
      %1662 = vst [vmem:[%s359 + $0x8] sm:$0xff] %v1660
      %p1663 = scmp.lt.s32.totalorder %s21, 1
      %s1664 = scalar_select %p1663, %s21, 1
      %s1665 = smul.addr %s1664, 2
      %s1666 = smul.addr %s1665, 8
      %s1667 = scalar_lea.vmem %s10, %s1666
      // Predicated region
      $region61: #{resblock_forward.1} parent=59 // pred_check
        %p1668 = pneg %p254
      $region62: #{resblock_forward.1} parent=59 // pred_check_branch
        %1670 = sbr.rel (%p1668) target = $region64
      $region63: #{resblock_forward.1} parent=59 // pred_region
        _
      $region64: #{resblock_forward.1} parent=59 // pred_fallthru
        _
    $region60: #{resblock_forward.1} parent=5 // pred_fallthru
      _
    %p1671 = scmp.le.s32.totalorder 2, %s16
    // Predicated region
    $region65: #{resblock_forward.1} parent=5 // pred_check
      %p1672 = pneg %p1671
    $region66: #{resblock_forward.1} parent=5 // pred_check_branch
      %1674 = sbr.rel (%p1672) target = $region68
    $region67: #{resblock_forward.1} parent=5 // pred_region
      %s1675 = ssub.s32 %s16, 2
      // Predicated region
      $region69: #{resblock_forward.1} parent=67 // pred_check
        %p1676 = pneg %p260
      $region70: #{resblock_forward.1} parent=67 // pred_check_branch
        %1678 = sbr.rel (%p1676) target = $region72
      $region71: #{resblock_forward.1} parent=67 // pred_region
        %p1679 = scmp.lt.s32.totalorder %s22, 1
        %s1680 = scalar_select %p1679, %s22, 1
        %s1681 = smul.addr %s1680, 2
        %s1682 = smul.addr %s1681, 8
        %s1683 = scalar_lea.vmem %s10, %s1682
      $region72: #{resblock_forward.1} parent=67 // pred_fallthru
        _
    $region68: #{resblock_forward.1} parent=5 // pred_fallthru
      _
  $region6: #{resblock_forward.1} parent=0 // loop_footer
    %s20 = sadd.s32 1, %s16
  $region7: #{resblock_forward.1} parent=0 // loop_footer_branch
    %15 = sbr.rel target = $region3
  $region8: #{resblock_forward.1} parent=0 // loop_exit
    _

</llo_original>
